<compile_context>
chip_gen: v7x
topology: tpu7x:2x2x1
jax: 0.10.0
libtpu: 0.0.40
codegen_flags: <defaults>
</compile_context>

<pallas_src>
import functools

import jax
import jax.numpy as jnp
from jax.experimental import pallas as pl
from jax.experimental.pallas import tpu as pltpu

BN_EPS = 1e-5


def _batchnorm_onepass(h, gamma, beta):
    """BatchNorm1d, training mode: batch stats over node axis (axis 0), biased
    variance, computed in a single pass (sum + sum-of-squares)."""
    mean = jnp.mean(h, axis=0, keepdims=True)
    mean_sq = jnp.mean(h * h, axis=0, keepdims=True)
    var = jnp.maximum(mean_sq - mean * mean, 0.0)
    return (h - mean) * jax.lax.rsqrt(var + BN_EPS) * gamma + beta


def _gin_fused_kernel(*refs, one_plus_eps, num_layers):
    """Fused forward for all GIN layers.

    Ref layout:
      refs[0]                      : adj   (N, N)  bf16 (exact 0/1)
      refs[1]                      : x0    (N, D0) f32
      refs[2 + 3*l : 5 + 3*l]      : w1_l, w2_l, pv_l   (per layer l)
      refs[2 + 3*L : 2 + 4*L]      : out_l (N, D_l) f32 (per layer l)
    pv_l rows: [b1, g1, be1, b2, g2, be2, g3, be3], each of width D_l.
    """
    adj_ref, x_ref = refs[0], refs[1]
    layer_refs = refs[2:2 + 3 * num_layers]
    out_refs = refs[2 + 3 * num_layers:]

    # adj is exact in bf16; cast once so matmul accumulation matches f32 torch.
    adj = adj_ref[...].astype(jnp.float32)
    h = x_ref[...]

    for l in range(num_layers):
        w1_ref, w2_ref, pv_ref = layer_refs[3 * l:3 * l + 3]
        pv = pv_ref[...]
        b1, g1, be1 = pv[0:1, :], pv[1:2, :], pv[2:3, :]
        b2, g2, be2 = pv[3:4, :], pv[4:5, :], pv[5:6, :]
        g3, be3 = pv[6:7, :], pv[7:8, :]

        # GINConv "sum" neighbor pooling + (1 + eps) * self feature.
        agg = jnp.dot(adj, h, preferred_element_type=jnp.float32)
        z = one_plus_eps * h + agg

        # MLP layer 1: Linear -> BN -> ReLU
        z = jnp.dot(z, w1_ref[...], preferred_element_type=jnp.float32) + b1
        z = jnp.maximum(_batchnorm_onepass(z, g1, be1), 0.0)

        # MLP layer 2 (linear output)
        z = jnp.dot(z, w2_ref[...], preferred_element_type=jnp.float32) + b2

        # ApplyNodeFunc: BN -> ReLU
        z = jnp.maximum(_batchnorm_onepass(z, g2, be2), 0.0)

        # _GIN per-layer BatchNorm1d followed by activation ("relu")
        z = _batchnorm_onepass(z, g3, be3)
        h = jnp.maximum(z, 0.0)
        out_refs[l][...] = h


def gin_forward(adj, x, params, eps=0.0):
    """Mirrors _GIN.forward: returns [input_features, layer0_out, layer1_out, ...].
    One fused pallas_call for the whole stack (graph fits in VMEM at these sizes)."""
    num_layers = len(params)
    n = x.shape[0]

    operands = [adj.astype(jnp.bfloat16), x.astype(jnp.float32)]
    for p in params:
        operands += [p["w1"], p["w2"], p["pv"]]

    out_shape = tuple(
        jax.ShapeDtypeStruct((n, p["w2"].shape[1]), jnp.float32) for p in params
    )
    vmem = pl.BlockSpec(memory_space=pltpu.MemorySpace.VMEM)
    kernel = functools.partial(
        _gin_fused_kernel, one_plus_eps=1.0 + eps, num_layers=num_layers
    )
    outs = pl.pallas_call(
        kernel,
        out_shape=out_shape,
        in_specs=[vmem] * len(operands),
        out_specs=tuple([vmem] * num_layers),
        compiler_params=pltpu.CompilerParams(vmem_limit_bytes=32 << 20),
    )(*operands)
    return [x] + list(outs)


def init_gin_params(key, input_dim, dimensions):
    """Deterministic synthetic parameters.  Shapes follow MLP(num_layers=2,
    in, hidden=dims[l], out=dims[l]) + three BatchNorm1d per layer.  The eight
    (1, D) vectors are packed into a single (8, D) block per layer."""
    params = []
    in_dim = input_dim
    for out_dim in dimensions:
        hidden = out_dim
        key, k1, k2 = jax.random.split(key, 3)
        pv = jnp.stack(
            [
                jnp.zeros((hidden,), jnp.float32),  # b1
                jnp.ones((hidden,), jnp.float32),   # g1
                jnp.zeros((hidden,), jnp.float32),  # be1
                jnp.zeros((out_dim,), jnp.float32),  # b2
                jnp.ones((out_dim,), jnp.float32),   # g2
                jnp.zeros((out_dim,), jnp.float32),  # be2
                jnp.ones((out_dim,), jnp.float32),   # g3
                jnp.zeros((out_dim,), jnp.float32),  # be3
            ],
            axis=0,
        )
        layer = {
            "w1": jax.random.normal(k1, (in_dim, hidden), jnp.float32) * 0.1,
            "w2": jax.random.normal(k2, (hidden, out_dim), jnp.float32) * 0.1,
            "pv": pv,
        }
        params.append(layer)
        in_dim = out_dim
    return params


def _bn_ref(h, gamma, beta):
    mean = jnp.mean(h, axis=0, keepdims=True)
    var = jnp.mean((h - mean) ** 2, axis=0, keepdims=True)
    return (h - mean) * jax.lax.rsqrt(var + BN_EPS) * gamma + beta


def gin_reference(adj, x, params, eps=0.0):
    """Pure-JAX reference mirroring the PyTorch forward (for validation)."""
    feats = [x]
    h = x
    for p in params:
        pv = p["pv"]
        b1, g1, be1 = pv[0:1], pv[1:2], pv[2:3]
        b2, g2, be2 = pv[3:4], pv[4:5], pv[5:6]
        g3, be3 = pv[6:7], pv[7:8]
        z = (1.0 + eps) * h + adj @ h
        z = jnp.maximum(_bn_ref(z @ p["w1"] + b1, g1, be1), 0.0)
        z = z @ p["w2"] + b2
        z = jnp.maximum(_bn_ref(z, g2, be2), 0.0)
        z = _bn_ref(z, g3, be3)
        h = jnp.maximum(z, 0.0)
        feats.append(h)
    return feats


if __name__ == "__main__":
    # Small graph: 64 nodes, 128-dim input features, two GIN layers of width 128
    # (lane-dense: feature dim is a multiple of 128), num_mlp_layers=2,
    # act="relu", _eps="False" (eps fixed at 0), "sum" neighbor pooling.
    N = 64
    INPUT_DIM = 128
    DIMENSIONS = (128, 128)

    key = jax.random.PRNGKey(0)
    k_adj, k_feat, k_par = jax.random.split(key, 3)

    # Random sparse-ish adjacency (no self loops); 0/1 values, exact in bf16.
    adj = (jax.random.uniform(k_adj, (N, N)) < 0.1).astype(jnp.float32)
    adj = adj * (1.0 - jnp.eye(N, dtype=jnp.float32))

    x = jax.random.normal(k_feat, (N, INPUT_DIM), jnp.float32)
    params = init_gin_params(k_par, INPUT_DIM, DIMENSIONS)

    feats = gin_forward(adj, x, params, eps=0.0)
    for f in feats:
        jax.block_until_ready(f)

    # Shape checks (mirrors _GIN.forward return structure).
    assert len(feats) == len(DIMENSIONS) + 1
    assert feats[0].shape == (N, INPUT_DIM)
    assert all(f.shape == (N, d) for f, d in zip(feats[1:], DIMENSIONS))

    # Numerical check against a pure-JAX reference of the PyTorch forward.
    ref = gin_reference(adj, x, params, eps=0.0)
    for got, want in zip(feats[1:], ref[1:]):
        assert jnp.allclose(got, want, rtol=1e-3, atol=1e-3), "mismatch vs reference"

    print("KERNEL_OK")
</pallas_src>

<mosaic_0001>
module attributes {stable_mosaic.version = 11 : i64} {
  func.func @_gin_fused_kernel(%arg0: memref<64x64xbf16, #tpu.memory_space<vmem>>, %arg1: memref<64x128xf32, #tpu.memory_space<vmem>>, %arg2: memref<128x128xf32, #tpu.memory_space<vmem>>, %arg3: memref<128x128xf32, #tpu.memory_space<vmem>>, %arg4: memref<8x128xf32, #tpu.memory_space<vmem>>, %arg5: memref<128x128xf32, #tpu.memory_space<vmem>>, %arg6: memref<128x128xf32, #tpu.memory_space<vmem>>, %arg7: memref<8x128xf32, #tpu.memory_space<vmem>>, %arg8: memref<64x128xf32, #tpu.memory_space<vmem>>, %arg9: memref<64x128xf32, #tpu.memory_space<vmem>>) attributes {dimension_semantics = [], scalar_prefetch = 0 : i64, scratch_operands = 0 : i64, tpu.core_type = #tpu.core_type<tc>} {
    %c0 = arith.constant 0 : index
    %c0_0 = arith.constant 0 : index
    %0 = vector.load %arg0[%c0, %c0_0] : memref<64x64xbf16, #tpu.memory_space<vmem>>, vector<64x64xbf16>
    %1 = arith.extf %0 : vector<64x64xbf16> to vector<64x64xf32>
    %c0_1 = arith.constant 0 : index
    %c0_2 = arith.constant 0 : index
    %2 = vector.load %arg1[%c0_1, %c0_2] : memref<64x128xf32, #tpu.memory_space<vmem>>, vector<64x128xf32>
    %c0_3 = arith.constant 0 : index
    %c0_4 = arith.constant 0 : index
    %3 = vector.load %arg4[%c0_3, %c0_4] : memref<8x128xf32, #tpu.memory_space<vmem>>, vector<8x128xf32>
    %4 = vector.extract_strided_slice %3 {offsets = [0, 0], sizes = [1, 128], strides = [1, 1]} : vector<8x128xf32> to vector<1x128xf32>
    %5 = vector.extract_strided_slice %3 {offsets = [1, 0], sizes = [1, 128], strides = [1, 1]} : vector<8x128xf32> to vector<1x128xf32>
    %6 = vector.extract_strided_slice %3 {offsets = [2, 0], sizes = [1, 128], strides = [1, 1]} : vector<8x128xf32> to vector<1x128xf32>
    %7 = vector.extract_strided_slice %3 {offsets = [3, 0], sizes = [1, 128], strides = [1, 1]} : vector<8x128xf32> to vector<1x128xf32>
    %8 = vector.extract_strided_slice %3 {offsets = [4, 0], sizes = [1, 128], strides = [1, 1]} : vector<8x128xf32> to vector<1x128xf32>
    %9 = vector.extract_strided_slice %3 {offsets = [5, 0], sizes = [1, 128], strides = [1, 1]} : vector<8x128xf32> to vector<1x128xf32>
    %10 = vector.extract_strided_slice %3 {offsets = [6, 0], sizes = [1, 128], strides = [1, 1]} : vector<8x128xf32> to vector<1x128xf32>
    %11 = vector.extract_strided_slice %3 {offsets = [7, 0], sizes = [1, 128], strides = [1, 1]} : vector<8x128xf32> to vector<1x128xf32>
    %cst = arith.constant dense<0.000000e+00> : vector<64x128xf32>
    %12 = tpu.matmul %1, %2, %cst {dimension_numbers = #tpu.dot_dimension_numbers<[1], [0], [0], [1], [0, 0, 1, 1], [], []>} : vector<64x64xf32>, vector<64x128xf32>, vector<64x128xf32> -> vector<64x128xf32>
    %cst_5 = arith.constant 1.000000e+00 : f32
    %13 = vector.broadcast %cst_5 : f32 to vector<64x128xf32>
    %14 = arith.mulf %13, %2 : vector<64x128xf32>
    %15 = arith.addf %14, %12 : vector<64x128xf32>
    %c0_6 = arith.constant 0 : index
    %c0_7 = arith.constant 0 : index
    %16 = vector.load %arg2[%c0_6, %c0_7] : memref<128x128xf32, #tpu.memory_space<vmem>>, vector<128x128xf32>
    %cst_8 = arith.constant dense<0.000000e+00> : vector<64x128xf32>
    %17 = tpu.matmul %15, %16, %cst_8 {dimension_numbers = #tpu.dot_dimension_numbers<[1], [0], [0], [1], [0, 0, 1, 1], [], []>} : vector<64x128xf32>, vector<128x128xf32>, vector<64x128xf32> -> vector<64x128xf32>
    %18 = vector.broadcast %4 : vector<1x128xf32> to vector<64x128xf32>
    %19 = arith.addf %17, %18 : vector<64x128xf32>
    %cst_9 = arith.constant dense<0.000000e+00> : vector<128xf32>
    %20 = vector.multi_reduction <add>, %19, %cst_9 [0] : vector<64x128xf32> to vector<128xf32>
    %21 = vector.shape_cast %20 : vector<128xf32> to vector<1x128xf32>
    %cst_10 = arith.constant 6.400000e+01 : f32
    %22 = vector.broadcast %cst_10 : f32 to vector<1x128xf32>
    %23 = arith.divf %21, %22 : vector<1x128xf32>
    %24 = arith.mulf %19, %19 : vector<64x128xf32>
    %cst_11 = arith.constant dense<0.000000e+00> : vector<128xf32>
    %25 = vector.multi_reduction <add>, %24, %cst_11 [0] : vector<64x128xf32> to vector<128xf32>
    %26 = vector.shape_cast %25 : vector<128xf32> to vector<1x128xf32>
    %cst_12 = arith.constant 6.400000e+01 : f32
    %27 = vector.broadcast %cst_12 : f32 to vector<1x128xf32>
    %28 = arith.divf %26, %27 : vector<1x128xf32>
    %29 = arith.mulf %23, %23 : vector<1x128xf32>
    %30 = arith.subf %28, %29 : vector<1x128xf32>
    %cst_13 = arith.constant 0.000000e+00 : f32
    %31 = vector.broadcast %cst_13 : f32 to vector<1x128xf32>
    %32 = arith.maximumf %30, %31 : vector<1x128xf32>
    %33 = vector.broadcast %23 : vector<1x128xf32> to vector<64x128xf32>
    %34 = arith.subf %19, %33 : vector<64x128xf32>
    %cst_14 = arith.constant 9.99999974E-6 : f32
    %35 = vector.broadcast %cst_14 : f32 to vector<1x128xf32>
    %36 = arith.addf %32, %35 : vector<1x128xf32>
    %37 = math.rsqrt %36 : vector<1x128xf32>
    %38 = vector.broadcast %37 : vector<1x128xf32> to vector<64x128xf32>
    %39 = arith.mulf %34, %38 : vector<64x128xf32>
    %40 = vector.broadcast %5 : vector<1x128xf32> to vector<64x128xf32>
    %41 = arith.mulf %39, %40 : vector<64x128xf32>
    %42 = vector.broadcast %6 : vector<1x128xf32> to vector<64x128xf32>
    %43 = arith.addf %41, %42 : vector<64x128xf32>
    %cst_15 = arith.constant 0.000000e+00 : f32
    %44 = vector.broadcast %cst_15 : f32 to vector<64x128xf32>
    %45 = arith.maximumf %43, %44 : vector<64x128xf32>
    %c0_16 = arith.constant 0 : index
    %c0_17 = arith.constant 0 : index
    %46 = vector.load %arg3[%c0_16, %c0_17] : memref<128x128xf32, #tpu.memory_space<vmem>>, vector<128x128xf32>
    %cst_18 = arith.constant dense<0.000000e+00> : vector<64x128xf32>
    %47 = tpu.matmul %45, %46, %cst_18 {dimension_numbers = #tpu.dot_dimension_numbers<[1], [0], [0], [1], [0, 0, 1, 1], [], []>} : vector<64x128xf32>, vector<128x128xf32>, vector<64x128xf32> -> vector<64x128xf32>
    %48 = vector.broadcast %7 : vector<1x128xf32> to vector<64x128xf32>
    %49 = arith.addf %47, %48 : vector<64x128xf32>
    %cst_19 = arith.constant dense<0.000000e+00> : vector<128xf32>
    %50 = vector.multi_reduction <add>, %49, %cst_19 [0] : vector<64x128xf32> to vector<128xf32>
    %51 = vector.shape_cast %50 : vector<128xf32> to vector<1x128xf32>
    %cst_20 = arith.constant 6.400000e+01 : f32
    %52 = vector.broadcast %cst_20 : f32 to vector<1x128xf32>
    %53 = arith.divf %51, %52 : vector<1x128xf32>
    %54 = arith.mulf %49, %49 : vector<64x128xf32>
    %cst_21 = arith.constant dense<0.000000e+00> : vector<128xf32>
    %55 = vector.multi_reduction <add>, %54, %cst_21 [0] : vector<64x128xf32> to vector<128xf32>
    %56 = vector.shape_cast %55 : vector<128xf32> to vector<1x128xf32>
    %cst_22 = arith.constant 6.400000e+01 : f32
    %57 = vector.broadcast %cst_22 : f32 to vector<1x128xf32>
    %58 = arith.divf %56, %57 : vector<1x128xf32>
    %59 = arith.mulf %53, %53 : vector<1x128xf32>
    %60 = arith.subf %58, %59 : vector<1x128xf32>
    %cst_23 = arith.constant 0.000000e+00 : f32
    %61 = vector.broadcast %cst_23 : f32 to vector<1x128xf32>
    %62 = arith.maximumf %60, %61 : vector<1x128xf32>
    %63 = vector.broadcast %53 : vector<1x128xf32> to vector<64x128xf32>
    %64 = arith.subf %49, %63 : vector<64x128xf32>
    %cst_24 = arith.constant 9.99999974E-6 : f32
    %65 = vector.broadcast %cst_24 : f32 to vector<1x128xf32>
    %66 = arith.addf %62, %65 : vector<1x128xf32>
    %67 = math.rsqrt %66 : vector<1x128xf32>
    %68 = vector.broadcast %67 : vector<1x128xf32> to vector<64x128xf32>
    %69 = arith.mulf %64, %68 : vector<64x128xf32>
    %70 = vector.broadcast %8 : vector<1x128xf32> to vector<64x128xf32>
    %71 = arith.mulf %69, %70 : vector<64x128xf32>
    %72 = vector.broadcast %9 : vector<1x128xf32> to vector<64x128xf32>
    %73 = arith.addf %71, %72 : vector<64x128xf32>
    %cst_25 = arith.constant 0.000000e+00 : f32
    %74 = vector.broadcast %cst_25 : f32 to vector<64x128xf32>
    %75 = arith.maximumf %73, %74 : vector<64x128xf32>
    %cst_26 = arith.constant dense<0.000000e+00> : vector<128xf32>
    %76 = vector.multi_reduction <add>, %75, %cst_26 [0] : vector<64x128xf32> to vector<128xf32>
    %77 = vector.shape_cast %76 : vector<128xf32> to vector<1x128xf32>
    %cst_27 = arith.constant 6.400000e+01 : f32
    %78 = vector.broadcast %cst_27 : f32 to vector<1x128xf32>
    %79 = arith.divf %77, %78 : vector<1x128xf32>
    %80 = arith.mulf %75, %75 : vector<64x128xf32>
    %cst_28 = arith.constant dense<0.000000e+00> : vector<128xf32>
    %81 = vector.multi_reduction <add>, %80, %cst_28 [0] : vector<64x128xf32> to vector<128xf32>
    %82 = vector.shape_cast %81 : vector<128xf32> to vector<1x128xf32>
    %cst_29 = arith.constant 6.400000e+01 : f32
    %83 = vector.broadcast %cst_29 : f32 to vector<1x128xf32>
    %84 = arith.divf %82, %83 : vector<1x128xf32>
    %85 = arith.mulf %79, %79 : vector<1x128xf32>
    %86 = arith.subf %84, %85 : vector<1x128xf32>
    %cst_30 = arith.constant 0.000000e+00 : f32
    %87 = vector.broadcast %cst_30 : f32 to vector<1x128xf32>
    %88 = arith.maximumf %86, %87 : vector<1x128xf32>
    %89 = vector.broadcast %79 : vector<1x128xf32> to vector<64x128xf32>
    %90 = arith.subf %75, %89 : vector<64x128xf32>
    %cst_31 = arith.constant 9.99999974E-6 : f32
    %91 = vector.broadcast %cst_31 : f32 to vector<1x128xf32>
    %92 = arith.addf %88, %91 : vector<1x128xf32>
    %93 = math.rsqrt %92 : vector<1x128xf32>
    %94 = vector.broadcast %93 : vector<1x128xf32> to vector<64x128xf32>
    %95 = arith.mulf %90, %94 : vector<64x128xf32>
    %96 = vector.broadcast %10 : vector<1x128xf32> to vector<64x128xf32>
    %97 = arith.mulf %95, %96 : vector<64x128xf32>
    %98 = vector.broadcast %11 : vector<1x128xf32> to vector<64x128xf32>
    %99 = arith.addf %97, %98 : vector<64x128xf32>
    %cst_32 = arith.constant 0.000000e+00 : f32
    %100 = vector.broadcast %cst_32 : f32 to vector<64x128xf32>
    %101 = arith.maximumf %99, %100 : vector<64x128xf32>
    %c0_33 = arith.constant 0 : index
    %c0_34 = arith.constant 0 : index
    %102 = vector.load %arg8[%c0_33, %c0_34] : memref<64x128xf32, #tpu.memory_space<vmem>>, vector<64x128xf32>
    tpu.vector_store %arg8[%c0_33, %c0_34], %101 {strides = array<i32>} : memref<64x128xf32, #tpu.memory_space<vmem>>, vector<64x128xf32>,
    %c0_35 = arith.constant 0 : index
    %c0_36 = arith.constant 0 : index
    %103 = vector.load %arg7[%c0_35, %c0_36] : memref<8x128xf32, #tpu.memory_space<vmem>>, vector<8x128xf32>
    %104 = vector.extract_strided_slice %103 {offsets = [0, 0], sizes = [1, 128], strides = [1, 1]} : vector<8x128xf32> to vector<1x128xf32>
    %105 = vector.extract_strided_slice %103 {offsets = [1, 0], sizes = [1, 128], strides = [1, 1]} : vector<8x128xf32> to vector<1x128xf32>
    %106 = vector.extract_strided_slice %103 {offsets = [2, 0], sizes = [1, 128], strides = [1, 1]} : vector<8x128xf32> to vector<1x128xf32>
    %107 = vector.extract_strided_slice %103 {offsets = [3, 0], sizes = [1, 128], strides = [1, 1]} : vector<8x128xf32> to vector<1x128xf32>
    %108 = vector.extract_strided_slice %103 {offsets = [4, 0], sizes = [1, 128], strides = [1, 1]} : vector<8x128xf32> to vector<1x128xf32>
    %109 = vector.extract_strided_slice %103 {offsets = [5, 0], sizes = [1, 128], strides = [1, 1]} : vector<8x128xf32> to vector<1x128xf32>
    %110 = vector.extract_strided_slice %103 {offsets = [6, 0], sizes = [1, 128], strides = [1, 1]} : vector<8x128xf32> to vector<1x128xf32>
    %111 = vector.extract_strided_slice %103 {offsets = [7, 0], sizes = [1, 128], strides = [1, 1]} : vector<8x128xf32> to vector<1x128xf32>
    %cst_37 = arith.constant dense<0.000000e+00> : vector<64x128xf32>
    %112 = tpu.matmul %1, %101, %cst_37 {dimension_numbers = #tpu.dot_dimension_numbers<[1], [0], [0], [1], [0, 0, 1, 1], [], []>} : vector<64x64xf32>, vector<64x128xf32>, vector<64x128xf32> -> vector<64x128xf32>
    %cst_38 = arith.constant 1.000000e+00 : f32
    %113 = vector.broadcast %cst_38 : f32 to vector<64x128xf32>
    %114 = arith.mulf %113, %101 : vector<64x128xf32>
    %115 = arith.addf %114, %112 : vector<64x128xf32>
    %c0_39 = arith.constant 0 : index
    %c0_40 = arith.constant 0 : index
    %116 = vector.load %arg5[%c0_39, %c0_40] : memref<128x128xf32, #tpu.memory_space<vmem>>, vector<128x128xf32>
    %cst_41 = arith.constant dense<0.000000e+00> : vector<64x128xf32>
    %117 = tpu.matmul %115, %116, %cst_41 {dimension_numbers = #tpu.dot_dimension_numbers<[1], [0], [0], [1], [0, 0, 1, 1], [], []>} : vector<64x128xf32>, vector<128x128xf32>, vector<64x128xf32> -> vector<64x128xf32>
    %118 = vector.broadcast %104 : vector<1x128xf32> to vector<64x128xf32>
    %119 = arith.addf %117, %118 : vector<64x128xf32>
    %cst_42 = arith.constant dense<0.000000e+00> : vector<128xf32>
    %120 = vector.multi_reduction <add>, %119, %cst_42 [0] : vector<64x128xf32> to vector<128xf32>
    %121 = vector.shape_cast %120 : vector<128xf32> to vector<1x128xf32>
    %cst_43 = arith.constant 6.400000e+01 : f32
    %122 = vector.broadcast %cst_43 : f32 to vector<1x128xf32>
    %123 = arith.divf %121, %122 : vector<1x128xf32>
    %124 = arith.mulf %119, %119 : vector<64x128xf32>
    %cst_44 = arith.constant dense<0.000000e+00> : vector<128xf32>
    %125 = vector.multi_reduction <add>, %124, %cst_44 [0] : vector<64x128xf32> to vector<128xf32>
    %126 = vector.shape_cast %125 : vector<128xf32> to vector<1x128xf32>
    %cst_45 = arith.constant 6.400000e+01 : f32
    %127 = vector.broadcast %cst_45 : f32 to vector<1x128xf32>
    %128 = arith.divf %126, %127 : vector<1x128xf32>
    %129 = arith.mulf %123, %123 : vector<1x128xf32>
    %130 = arith.subf %128, %129 : vector<1x128xf32>
    %cst_46 = arith.constant 0.000000e+00 : f32
    %131 = vector.broadcast %cst_46 : f32 to vector<1x128xf32>
    %132 = arith.maximumf %130, %131 : vector<1x128xf32>
    %133 = vector.broadcast %123 : vector<1x128xf32> to vector<64x128xf32>
    %134 = arith.subf %119, %133 : vector<64x128xf32>
    %cst_47 = arith.constant 9.99999974E-6 : f32
    %135 = vector.broadcast %cst_47 : f32 to vector<1x128xf32>
    %136 = arith.addf %132, %135 : vector<1x128xf32>
    %137 = math.rsqrt %136 : vector<1x128xf32>
    %138 = vector.broadcast %137 : vector<1x128xf32> to vector<64x128xf32>
    %139 = arith.mulf %134, %138 : vector<64x128xf32>
    %140 = vector.broadcast %105 : vector<1x128xf32> to vector<64x128xf32>
    %141 = arith.mulf %139, %140 : vector<64x128xf32>
    %142 = vector.broadcast %106 : vector<1x128xf32> to vector<64x128xf32>
    %143 = arith.addf %141, %142 : vector<64x128xf32>
    %cst_48 = arith.constant 0.000000e+00 : f32
    %144 = vector.broadcast %cst_48 : f32 to vector<64x128xf32>
    %145 = arith.maximumf %143, %144 : vector<64x128xf32>
    %c0_49 = arith.constant 0 : index
    %c0_50 = arith.constant 0 : index
    %146 = vector.load %arg6[%c0_49, %c0_50] : memref<128x128xf32, #tpu.memory_space<vmem>>, vector<128x128xf32>
    %cst_51 = arith.constant dense<0.000000e+00> : vector<64x128xf32>
    %147 = tpu.matmul %145, %146, %cst_51 {dimension_numbers = #tpu.dot_dimension_numbers<[1], [0], [0], [1], [0, 0, 1, 1], [], []>} : vector<64x128xf32>, vector<128x128xf32>, vector<64x128xf32> -> vector<64x128xf32>
    %148 = vector.broadcast %107 : vector<1x128xf32> to vector<64x128xf32>
    %149 = arith.addf %147, %148 : vector<64x128xf32>
    %cst_52 = arith.constant dense<0.000000e+00> : vector<128xf32>
    %150 = vector.multi_reduction <add>, %149, %cst_52 [0] : vector<64x128xf32> to vector<128xf32>
    %151 = vector.shape_cast %150 : vector<128xf32> to vector<1x128xf32>
    %cst_53 = arith.constant 6.400000e+01 : f32
    %152 = vector.broadcast %cst_53 : f32 to vector<1x128xf32>
    %153 = arith.divf %151, %152 : vector<1x128xf32>
    %154 = arith.mulf %149, %149 : vector<64x128xf32>
    %cst_54 = arith.constant dense<0.000000e+00> : vector<128xf32>
    %155 = vector.multi_reduction <add>, %154, %cst_54 [0] : vector<64x128xf32> to vector<128xf32>
    %156 = vector.shape_cast %155 : vector<128xf32> to vector<1x128xf32>
    %cst_55 = arith.constant 6.400000e+01 : f32
    %157 = vector.broadcast %cst_55 : f32 to vector<1x128xf32>
    %158 = arith.divf %156, %157 : vector<1x128xf32>
    %159 = arith.mulf %153, %153 : vector<1x128xf32>
    %160 = arith.subf %158, %159 : vector<1x128xf32>
    %cst_56 = arith.constant 0.000000e+00 : f32
    %161 = vector.broadcast %cst_56 : f32 to vector<1x128xf32>
    %162 = arith.maximumf %160, %161 : vector<1x128xf32>
    %163 = vector.broadcast %153 : vector<1x128xf32> to vector<64x128xf32>
    %164 = arith.subf %149, %163 : vector<64x128xf32>
    %cst_57 = arith.constant 9.99999974E-6 : f32
    %165 = vector.broadcast %cst_57 : f32 to vector<1x128xf32>
    %166 = arith.addf %162, %165 : vector<1x128xf32>
    %167 = math.rsqrt %166 : vector<1x128xf32>
    %168 = vector.broadcast %167 : vector<1x128xf32> to vector<64x128xf32>
    %169 = arith.mulf %164, %168 : vector<64x128xf32>
    %170 = vector.broadcast %108 : vector<1x128xf32> to vector<64x128xf32>
    %171 = arith.mulf %169, %170 : vector<64x128xf32>
    %172 = vector.broadcast %109 : vector<1x128xf32> to vector<64x128xf32>
    %173 = arith.addf %171, %172 : vector<64x128xf32>
    %cst_58 = arith.constant 0.000000e+00 : f32
    %174 = vector.broadcast %cst_58 : f32 to vector<64x128xf32>
    %175 = arith.maximumf %173, %174 : vector<64x128xf32>
    %cst_59 = arith.constant dense<0.000000e+00> : vector<128xf32>
    %176 = vector.multi_reduction <add>, %175, %cst_59 [0] : vector<64x128xf32> to vector<128xf32>
    %177 = vector.shape_cast %176 : vector<128xf32> to vector<1x128xf32>
    %cst_60 = arith.constant 6.400000e+01 : f32
    %178 = vector.broadcast %cst_60 : f32 to vector<1x128xf32>
    %179 = arith.divf %177, %178 : vector<1x128xf32>
    %180 = arith.mulf %175, %175 : vector<64x128xf32>
    %cst_61 = arith.constant dense<0.000000e+00> : vector<128xf32>
    %181 = vector.multi_reduction <add>, %180, %cst_61 [0] : vector<64x128xf32> to vector<128xf32>
    %182 = vector.shape_cast %181 : vector<128xf32> to vector<1x128xf32>
    %cst_62 = arith.constant 6.400000e+01 : f32
    %183 = vector.broadcast %cst_62 : f32 to vector<1x128xf32>
    %184 = arith.divf %182, %183 : vector<1x128xf32>
    %185 = arith.mulf %179, %179 : vector<1x128xf32>
    %186 = arith.subf %184, %185 : vector<1x128xf32>
    %cst_63 = arith.constant 0.000000e+00 : f32
    %187 = vector.broadcast %cst_63 : f32 to vector<1x128xf32>
    %188 = arith.maximumf %186, %187 : vector<1x128xf32>
    %189 = vector.broadcast %179 : vector<1x128xf32> to vector<64x128xf32>
    %190 = arith.subf %175, %189 : vector<64x128xf32>
    %cst_64 = arith.constant 9.99999974E-6 : f32
    %191 = vector.broadcast %cst_64 : f32 to vector<1x128xf32>
    %192 = arith.addf %188, %191 : vector<1x128xf32>
    %193 = math.rsqrt %192 : vector<1x128xf32>
    %194 = vector.broadcast %193 : vector<1x128xf32> to vector<64x128xf32>
    %195 = arith.mulf %190, %194 : vector<64x128xf32>
    %196 = vector.broadcast %110 : vector<1x128xf32> to vector<64x128xf32>
    %197 = arith.mulf %195, %196 : vector<64x128xf32>
    %198 = vector.broadcast %111 : vector<1x128xf32> to vector<64x128xf32>
    %199 = arith.addf %197, %198 : vector<64x128xf32>
    %cst_65 = arith.constant 0.000000e+00 : f32
    %200 = vector.broadcast %cst_65 : f32 to vector<64x128xf32>
    %201 = arith.maximumf %199, %200 : vector<64x128xf32>
    %c0_66 = arith.constant 0 : index
    %c0_67 = arith.constant 0 : index
    %202 = vector.load %arg9[%c0_66, %c0_67] : memref<64x128xf32, #tpu.memory_space<vmem>>, vector<64x128xf32>
    tpu.vector_store %arg9[%c0_66, %c0_67], %201 {strides = array<i32>} : memref<64x128xf32, #tpu.memory_space<vmem>>, vector<64x128xf32>,
    return
  }
}

</mosaic_0001>

<llo_original>
// kernel: tpu_custom_call.1
$region0: #{tpu_custom_call.1}
  #allocation0 [shape = 'u32[]', space=smem, size = 0x4, offset = 0x4, fixed_abs, tag = 'smem constant byte address 0x4 - core index']
  #allocation1 [shape = 'u32[144,128]{1,0:T(1,128)}', space=vmem, size = 0x12000, scoped, tag = 'internal scratch']
  %s0 = inlined_call_operand.hbm [shape: bf16[64,64], index: 0, kind: input, shape index: {}]
  %s1 = inlined_call_operand.hbm [shape: f32[64,128], index: 1, kind: input, shape index: {}]
  %s2 = inlined_call_operand.hbm [shape: f32[128,128], index: 2, kind: input, shape index: {}]
  %s3 = inlined_call_operand.hbm [shape: f32[128,128], index: 3, kind: input, shape index: {}]
  %s4 = inlined_call_operand.vmem [shape: f32[8,128], index: 4, kind: input, shape index: {}]
  %s5 = inlined_call_operand.hbm [shape: f32[128,128], index: 5, kind: input, shape index: {}]
  %s6 = inlined_call_operand.hbm [shape: f32[128,128], index: 6, kind: input, shape index: {}]
  %s7 = inlined_call_operand.vmem [shape: f32[8,128], index: 7, kind: input, shape index: {}]
  %s8 = inlined_call_operand.hbm [shape: f32[64,128], index: 8, kind: output, shape index: {0}]
  %s9 = inlined_call_operand.hbm [shape: f32[64,128], index: 9, kind: output, shape index: {1}]
  %10 = xla_tuple %s8, %s9
  %s11 = sld [smem:[#allocation0]]
  $region74: #{tpu_custom_call.1} parent=0
    _
  %s13 = ssub.s32 1, %s11
  %s14 = scalar_select 0, %s13, %s11
  $region1: #{tpu_custom_call.1} parent=0
    #allocation2 [shape = 'u8[16384]{0}', space=vmem, size = 0x4000, scoped, tag = 'input window, operand 0, single buffered']
    #allocation3 [shape = 's32[1]{0}', space=sflag, size = 0x4, scoped, tag = 'scoped memory for tpu_custom_call.1']
    #allocation4 [shape = 's32[1]{0}', space=sflag, size = 0x4, scoped, tag = 'scoped memory for tpu_custom_call.1']
    #allocation5 [shape = 'u8[32768]{0}', space=vmem, size = 0x8000, scoped, tag = 'input window, operand 1, single buffered']
    #allocation6 [shape = 's32[1]{0}', space=sflag, size = 0x4, scoped, tag = 'scoped memory for tpu_custom_call.1']
    #allocation7 [shape = 'u8[65536]{0}', space=vmem, size = 0x10000, scoped, tag = 'input window, operand 2, single buffered']
    #allocation8 [shape = 'u8[65536]{0}', space=vmem, size = 0x10000, scoped, tag = 'input window, operand 3, single buffered']
    #allocation9 [shape = 's32[1]{0}', space=sflag, size = 0x4, scoped, tag = 'scoped memory for tpu_custom_call.1']
    #allocation10 [shape = 'u8[65536]{0}', space=vmem, size = 0x10000, scoped, tag = 'input window, operand 5, single buffered']
    #allocation11 [shape = 'u8[65536]{0}', space=vmem, size = 0x10000, scoped, tag = 'input window, operand 6, single buffered']
    #allocation12 [shape = 's32[1]{0}', space=sflag, size = 0x4, scoped, tag = 'scoped memory for tpu_custom_call.1']
    #allocation13 [shape = 'u8[32768]{0}', space=vmem, size = 0x8000, scoped, tag = 'output window, operand 0, single buffered']
    #allocation14 [shape = 'u8[32768]{0}', space=vmem, size = 0x8000, scoped, tag = 'output window, operand 1, single buffered']
    #allocation15 [shape = 's32[1]{0}', space=sflag, size = 0x4, scoped, tag = 'scoped memory for tpu_custom_call.1']
    %15 = vsyncpa [#allocation3], 0
    %16 = vsyncpa [#allocation6], 0
    %17 = vsyncpa [#allocation9], 0
    %18 = vsyncpa [#allocation12], 0
    %19 = vsyncpa [#allocation4], 0
    %20 = vsyncpa [#allocation15], 0
    // Predicated region
    $region2: #{tpu_custom_call.1} parent=1 // pred_check
      _
    $region3: #{tpu_custom_call.1} parent=1 // pred_check_branch
      %22 = sbr.rel (0) target = $region5
    $region4: #{tpu_custom_call.1} parent=1 // pred_region
      %s24 = ssub.s32 512, 512
      %25 = vsyncadd [#allocation3], %s24
      %s26 = sshll.u32 [#allocation2], 4
      %s27 = int_to_ptr.vmem [resolvable:$true] %s26
      %32 = dma.hbm_to_vmem [thread:$0]  %s0, 512, %s27, [#allocation3], 64, 64, 4
    $region5: #{tpu_custom_call.1} parent=1 // pred_fallthru
      _
    // Predicated region
    $region6: #{tpu_custom_call.1} parent=1 // pred_check
      _
    $region7: #{tpu_custom_call.1} parent=1 // pred_check_branch
      %34 = sbr.rel (0) target = $region9
    $region8: #{tpu_custom_call.1} parent=1 // pred_region
      %s36 = ssub.s32 1024, 1024
      %37 = vsyncadd [#allocation6], %s36
      %s38 = sshll.u32 [#allocation5], 4
      %s39 = int_to_ptr.vmem [resolvable:$true] %s38
      %44 = dma.hbm_to_vmem [thread:$0]  %s1, 1024, %s39, [#allocation6], 128, 128, 8
    $region9: #{tpu_custom_call.1} parent=1 // pred_fallthru
      _
    // Predicated region
    $region10: #{tpu_custom_call.1} parent=1 // pred_check
      _
    $region11: #{tpu_custom_call.1} parent=1 // pred_check_branch
      %46 = sbr.rel (0) target = $region13
    $region12: #{tpu_custom_call.1} parent=1 // pred_region
      %s48 = ssub.s32 2048, 2048
      %49 = vsyncadd [#allocation6], %s48
      %s50 = sshll.u32 [#allocation7], 4
      %s51 = int_to_ptr.vmem [resolvable:$true] %s50
      %56 = dma.hbm_to_vmem [thread:$0]  %s2, 2048, %s51, [#allocation6], 128, 128, 8
    $region13: #{tpu_custom_call.1} parent=1 // pred_fallthru
      _
    // Predicated region
    $region14: #{tpu_custom_call.1} parent=1 // pred_check
      _
    $region15: #{tpu_custom_call.1} parent=1 // pred_check_branch
      %58 = sbr.rel (0) target = $region17
    $region16: #{tpu_custom_call.1} parent=1 // pred_region
      %s60 = ssub.s32 2048, 2048
      %61 = vsyncadd [#allocation9], %s60
      %s62 = sshll.u32 [#allocation8], 4
      %s63 = int_to_ptr.vmem [resolvable:$true] %s62
      %68 = dma.hbm_to_vmem [thread:$0]  %s3, 2048, %s63, [#allocation9], 128, 128, 8
    $region17: #{tpu_custom_call.1} parent=1 // pred_fallthru
      _
    // Predicated region
    $region18: #{tpu_custom_call.1} parent=1 // pred_check
      _
    $region19: #{tpu_custom_call.1} parent=1 // pred_check_branch
      %70 = sbr.rel (0) target = $region21
    $region20: #{tpu_custom_call.1} parent=1 // pred_region
      _
    $region21: #{tpu_custom_call.1} parent=1 // pred_fallthru
      _
    // Predicated region
    $region22: #{tpu_custom_call.1} parent=1 // pred_check
      _
    $region23: #{tpu_custom_call.1} parent=1 // pred_check_branch
      %72 = sbr.rel (0) target = $region25
    $region24: #{tpu_custom_call.1} parent=1 // pred_region
      %s74 = ssub.s32 2048, 2048
      %75 = vsyncadd [#allocation9], %s74
      %s76 = sshll.u32 [#allocation10], 4
      %s77 = int_to_ptr.vmem [resolvable:$true] %s76
      %82 = dma.hbm_to_vmem [thread:$0]  %s5, 2048, %s77, [#allocation9], 128, 128, 8
    $region25: #{tpu_custom_call.1} parent=1 // pred_fallthru
      _
    // Predicated region
    $region26: #{tpu_custom_call.1} parent=1 // pred_check
      _
    $region27: #{tpu_custom_call.1} parent=1 // pred_check_branch
      %84 = sbr.rel (0) target = $region29
    $region28: #{tpu_custom_call.1} parent=1 // pred_region
      %s86 = ssub.s32 2048, 2048
      %87 = vsyncadd [#allocation12], %s86
      %s88 = sshll.u32 [#allocation11], 4
      %s89 = int_to_ptr.vmem [resolvable:$true] %s88
      %94 = dma.hbm_to_vmem [thread:$0]  %s6, 2048, %s89, [#allocation12], 128, 128, 8
    $region29: #{tpu_custom_call.1} parent=1 // pred_fallthru
      _
    // Predicated region
    $region30: #{tpu_custom_call.1} parent=1 // pred_check
      _
    $region31: #{tpu_custom_call.1} parent=1 // pred_check_branch
      %96 = sbr.rel (0) target = $region33
    $region32: #{tpu_custom_call.1} parent=1 // pred_region
      _
    $region33: #{tpu_custom_call.1} parent=1 // pred_fallthru
      _
    // Predicated region
    $region34: #{tpu_custom_call.1} parent=1 // pred_check
      _
    $region35: #{tpu_custom_call.1} parent=1 // pred_check_branch
      %98 = sbr.rel (0) target = $region37
    $region36: #{tpu_custom_call.1} parent=1 // pred_region
      %99 = dma.done [#allocation3], 512
    $region37: #{tpu_custom_call.1} parent=1 // pred_fallthru
      _
    // Predicated region
    $region38: #{tpu_custom_call.1} parent=1 // pred_check
      _
    $region39: #{tpu_custom_call.1} parent=1 // pred_check_branch
      %101 = sbr.rel (0) target = $region41
    $region40: #{tpu_custom_call.1} parent=1 // pred_region
      %102 = dma.done [#allocation6], 1024
    $region41: #{tpu_custom_call.1} parent=1 // pred_fallthru
      _
    // Predicated region
    $region42: #{tpu_custom_call.1} parent=1 // pred_check
      _
    $region43: #{tpu_custom_call.1} parent=1 // pred_check_branch
      %104 = sbr.rel (0) target = $region45
    $region44: #{tpu_custom_call.1} parent=1 // pred_region
      %105 = dma.done [#allocation6], 2048
    $region45: #{tpu_custom_call.1} parent=1 // pred_fallthru
      _
    // Predicated region
    $region46: #{tpu_custom_call.1} parent=1 // pred_check
      _
    $region47: #{tpu_custom_call.1} parent=1 // pred_check_branch
      %107 = sbr.rel (0) target = $region49
    $region48: #{tpu_custom_call.1} parent=1 // pred_region
      %108 = dma.done [#allocation9], 2048
    $region49: #{tpu_custom_call.1} parent=1 // pred_fallthru
      _
    // Predicated region
    $region50: #{tpu_custom_call.1} parent=1 // pred_check
      _
    $region51: #{tpu_custom_call.1} parent=1 // pred_check_branch
      %110 = sbr.rel (0) target = $region53
    $region52: #{tpu_custom_call.1} parent=1 // pred_region
      %111 = dma.done [#allocation9], 2048
    $region53: #{tpu_custom_call.1} parent=1 // pred_fallthru
      _
    // Predicated region
    $region54: #{tpu_custom_call.1} parent=1 // pred_check
      _
    $region55: #{tpu_custom_call.1} parent=1 // pred_check_branch
      %113 = sbr.rel (0) target = $region57
    $region56: #{tpu_custom_call.1} parent=1 // pred_region
      %114 = dma.done [#allocation12], 2048
    $region57: #{tpu_custom_call.1} parent=1 // pred_fallthru
      _
    %v115 = vld [vmem:[#allocation2] sm:$0xf]
    %v116 = vld [vmem:[#allocation2 + $0x4] sm:$0xf]
    %v117 = vld [vmem:[#allocation2 + $0x8] sm:$0xf]
    %v118 = vld [vmem:[#allocation2 + $0xc] sm:$0xf]
    %v119 = vld [vmem:[#allocation2 + $0x10] sm:$0xf]
    %v120 = vld [vmem:[#allocation2 + $0x14] sm:$0xf]
    %v121 = vld [vmem:[#allocation2 + $0x18] sm:$0xf]
    %v122 = vld [vmem:[#allocation2 + $0x1c] sm:$0xf]
    %v123 = vunpack.c.l.bf16 %v115
    %v124 = vunpack.c.l.bf16 %v116
    %v125 = vunpack.c.l.bf16 %v117
    %v126 = vunpack.c.l.bf16 %v118
    %v127 = vunpack.c.l.bf16 %v119
    %v128 = vunpack.c.l.bf16 %v120
    %v129 = vunpack.c.l.bf16 %v121
    %v130 = vunpack.c.l.bf16 %v122
    %v131 = vld [vmem:[#allocation5] sm:$0xff]
    %v132 = vld [vmem:[#allocation5 + $0x8] sm:$0xff]
    %v133 = vld [vmem:[#allocation5 + $0x10] sm:$0xff]
    %v134 = vld [vmem:[#allocation5 + $0x18] sm:$0xff]
    %v135 = vld [vmem:[#allocation5 + $0x20] sm:$0xff]
    %v136 = vld [vmem:[#allocation5 + $0x28] sm:$0xff]
    %v137 = vld [vmem:[#allocation5 + $0x30] sm:$0xff]
    %v138 = vld [vmem:[#allocation5 + $0x38] sm:$0xff]
    %v139 = vld [vmem:[%s4] sm:$0xff]
    %vm140 = vcmask 523264
    %v142 = vsel %vm140, %v123, 0
    %v145 = vsel %vm140, %v124, 0
    %v148 = vsel %vm140, %v125, 0
    %v151 = vsel %vm140, %v126, 0
    %v154 = vsel %vm140, %v127, 0
    %v157 = vsel %vm140, %v128, 0
    %v160 = vsel %vm140, %v129, 0
    %v163 = vsel %vm140, %v130, 0
    %165 = vmatprep.subr.mxu0 0.0
    %166 = vmatpush1.msra.mxu0 %v131
    %167 = vmatprep.subr.mxu0 0.0
    %168 = vmatpush1.msra.mxu0 %v132
    %169 = vmatprep.subr.mxu0 0.0
    %170 = vmatpush1.msra.mxu0 %v133
    %171 = vmatprep.subr.mxu0 0.0
    %172 = vmatpush1.msra.mxu0 %v134
    %173 = vmatprep.subr.mxu0 0.0
    %174 = vmatpush1.msra.mxu0 %v135
    %175 = vmatprep.subr.mxu0 0.0
    %176 = vmatpush1.msra.mxu0 %v136
    %177 = vmatprep.subr.mxu0 0.0
    %178 = vmatpush1.msra.mxu0 %v137
    %179 = vmatprep.subr.mxu0 0.0
    %180 = vmatpush1.msra.mxu0 %v138
    %181 = vmatprep.subr.mxu0 0.0
    %182 = vmatpush1.msra.mxu0 0.0
    %183 = vmatprep.subr.mxu0 0.0
    %184 = vmatpush1.msra.mxu0 0.0
    %185 = vmatprep.subr.mxu0 0.0
    %186 = vmatpush1.msra.mxu0 0.0
    %187 = vmatprep.subr.mxu0 0.0
    %188 = vmatpush1.msra.mxu0 0.0
    %189 = vmatprep.subr.mxu0 0.0
    %190 = vmatpush1.msra.mxu0 0.0
    %191 = vmatprep.subr.mxu0 0.0
    %192 = vmatpush1.msra.mxu0 0.0
    %193 = vmatprep.subr.mxu0 0.0
    %194 = vmatpush1.msra.mxu0 0.0
    %195 = vmatprep.subr.mxu0 0.0
    %196 = vmatpush1.msra.mxu0 0.0
    %197 = vmatprep.subr.mxu0 0.0
    %198 = vmatpush1.msra.mxu0 0.0
    %199 = vmatprep.subr.mxu0 0.0
    %200 = vmatpush1.msra.mxu0 0.0
    %201 = vmatprep.subr.mxu0 0.0
    %202 = vmatpush1.msra.mxu0 0.0
    %203 = vmatprep.subr.mxu0 0.0
    %204 = vmatpush1.msra.mxu0 0.0
    %205 = vmatprep.subr.mxu0 0.0
    %206 = vmatpush1.msra.mxu0 0.0
    %207 = vmatprep.subr.mxu0 0.0
    %208 = vmatpush1.msra.mxu0 0.0
    %209 = vmatprep.subr.mxu0 0.0
    %210 = vmatpush1.msra.mxu0 0.0
    %211 = vmatprep.subr.mxu0 0.0
    %212 = vmatpush1.msra.mxu0 0.0
    %213 = vmatprep.subr.mxu0 0.0
    %214 = vmatpush1.msra.mxu0 0.0
    %215 = vmatprep.subr.mxu0 0.0
    %216 = vmatpush1.msra.mxu0 0.0
    %217 = vmatprep.subr.mxu0 0.0
    %218 = vmatpush1.msra.mxu0 0.0
    %219 = vmatprep.subr.mxu0 0.0
    %220 = vmatpush1.msra.mxu0 0.0
    %221 = vmatprep.subr.mxu0 0.0
    %222 = vmatpush1.msra.mxu0 0.0
    %223 = vmatprep.subr.mxu0 0.0
    %224 = vmatpush1.msra.mxu0 0.0
    %225 = vmatprep.subr.mxu0 0.0
    %226 = vmatpush1.msra.mxu0 0.0
    %227 = vmatprep.subr.mxu0 0.0
    %228 = vmatpush1.msra.mxu0 0.0
    %229 = vmatprep.mubr.f32.mxu0 0.0
    %230 = vmatmul.mubr.f32.gmra.mrb[0].mxu0 %v142
    %v231 = vpop.f32.mrb[0].mxu0
    %v232 = vadd.f32 0.0, %v231
    %v233 = vpop.f32.mrb[0].mxu0
    %234 = vmatprep.mubr.f32.mxu0 0.0
    %235 = vmatmul.mubr.f32.gmra.mrb[0].mxu0 %v145
    %v236 = vpop.f32.mrb[0].mxu0
    %v237 = vadd.f32 0.0, %v236
    %v238 = vpop.f32.mrb[0].mxu0
    %239 = vmatprep.mubr.f32.mxu0 0.0
    %240 = vmatmul.mubr.f32.gmra.mrb[0].mxu0 %v148
    %v241 = vpop.f32.mrb[0].mxu0
    %v242 = vadd.f32 0.0, %v241
    %v243 = vpop.f32.mrb[0].mxu0
    %244 = vmatprep.mubr.f32.mxu0 0.0
    %245 = vmatmul.mubr.f32.gmra.mrb[0].mxu0 %v151
    %v246 = vpop.f32.mrb[0].mxu0
    %v247 = vadd.f32 0.0, %v246
    %v248 = vpop.f32.mrb[0].mxu0
    %249 = vmatprep.mubr.f32.mxu0 0.0
    %250 = vmatmul.mubr.f32.gmra.mrb[0].mxu0 %v154
    %v251 = vpop.f32.mrb[0].mxu0
    %v252 = vadd.f32 0.0, %v251
    %v253 = vpop.f32.mrb[0].mxu0
    %254 = vmatprep.mubr.f32.mxu0 0.0
    %255 = vmatmul.mubr.f32.gmra.mrb[0].mxu0 %v157
    %v256 = vpop.f32.mrb[0].mxu0
    %v257 = vadd.f32 0.0, %v256
    %v258 = vpop.f32.mrb[0].mxu0
    %259 = vmatprep.mubr.f32.mxu0 0.0
    %260 = vmatmul.mubr.f32.gmra.mrb[0].mxu0 %v160
    %v261 = vpop.f32.mrb[0].mxu0
    %v262 = vadd.f32 0.0, %v261
    %v263 = vpop.f32.mrb[0].mxu0
    %264 = vmatprep.mubr.f32.mxu0 0.0
    %265 = vmatmul.mubr.f32.gmra.mrb[0].mxu0 %v163
    %v266 = vpop.f32.mrb[0].mxu0
    %v267 = vadd.f32 0.0, %v266
    %v268 = vpop.f32.mrb[0].mxu0
    %269 = vdwg.mxu0
    %v270 = vadd.f32 %v131, %v232
    %v271 = vadd.f32 %v132, %v237
    %v272 = vadd.f32 %v133, %v242
    %v273 = vadd.f32 %v134, %v247
    %v274 = vadd.f32 %v135, %v252
    %v275 = vadd.f32 %v136, %v257
    %v276 = vadd.f32 %v137, %v262
    %v277 = vadd.f32 %v138, %v267
    %v278 = vld [vmem:[#allocation7] sm:$0xff]
    %v279 = vld [vmem:[#allocation7 + $0x8] sm:$0xff]
    %v280 = vld [vmem:[#allocation7 + $0x10] sm:$0xff]
    %v281 = vld [vmem:[#allocation7 + $0x18] sm:$0xff]
    %v282 = vld [vmem:[#allocation7 + $0x20] sm:$0xff]
    %v283 = vld [vmem:[#allocation7 + $0x28] sm:$0xff]
    %v284 = vld [vmem:[#allocation7 + $0x30] sm:$0xff]
    %v285 = vld [vmem:[#allocation7 + $0x38] sm:$0xff]
    %v286 = vld [vmem:[#allocation7 + $0x40] sm:$0xff]
    %v287 = vld [vmem:[#allocation7 + $0x48] sm:$0xff]
    %v288 = vld [vmem:[#allocation7 + $0x50] sm:$0xff]
    %v289 = vld [vmem:[#allocation7 + $0x58] sm:$0xff]
    %v290 = vld [vmem:[#allocation7 + $0x60] sm:$0xff]
    %v291 = vld [vmem:[#allocation7 + $0x68] sm:$0xff]
    %v292 = vld [vmem:[#allocation7 + $0x70] sm:$0xff]
    %v293 = vld [vmem:[#allocation7 + $0x78] sm:$0xff]
    %v294 = vlaneseq
    %v295 = vshrl.u32 %v294, 7
    %v296 = vsub.s32 0, %v295
    %v297 = vrot.slane %v139, %v296
    %298 = vmatprep.subr.mxu0 0.0
    %299 = vmatpush1.msra.mxu0 %v278
    %300 = vmatprep.subr.mxu0 0.0
    %301 = vmatpush1.msra.mxu0 %v279
    %302 = vmatprep.subr.mxu0 0.0
    %303 = vmatpush1.msra.mxu0 %v280
    %304 = vmatprep.subr.mxu0 0.0
    %305 = vmatpush1.msra.mxu0 %v281
    %306 = vmatprep.subr.mxu0 0.0
    %307 = vmatpush1.msra.mxu0 %v282
    %308 = vmatprep.subr.mxu0 0.0
    %309 = vmatpush1.msra.mxu0 %v283
    %310 = vmatprep.subr.mxu0 0.0
    %311 = vmatpush1.msra.mxu0 %v284
    %312 = vmatprep.subr.mxu0 0.0
    %313 = vmatpush1.msra.mxu0 %v285
    %314 = vmatprep.subr.mxu0 0.0
    %315 = vmatpush1.msra.mxu0 %v286
    %316 = vmatprep.subr.mxu0 0.0
    %317 = vmatpush1.msra.mxu0 %v287
    %318 = vmatprep.subr.mxu0 0.0
    %319 = vmatpush1.msra.mxu0 %v288
    %320 = vmatprep.subr.mxu0 0.0
    %321 = vmatpush1.msra.mxu0 %v289
    %322 = vmatprep.subr.mxu0 0.0
    %323 = vmatpush1.msra.mxu0 %v290
    %324 = vmatprep.subr.mxu0 0.0
    %325 = vmatpush1.msra.mxu0 %v291
    %326 = vmatprep.subr.mxu0 0.0
    %327 = vmatpush1.msra.mxu0 %v292
    %328 = vmatprep.subr.mxu0 0.0
    %329 = vmatpush1.msra.mxu0 %v293
    %330 = vmatprep.subr.mxu0 0.0
    %331 = vmatpush1.msra.mxu0 0.0
    %332 = vmatprep.subr.mxu0 0.0
    %333 = vmatpush1.msra.mxu0 0.0
    %334 = vmatprep.subr.mxu0 0.0
    %335 = vmatpush1.msra.mxu0 0.0
    %336 = vmatprep.subr.mxu0 0.0
    %337 = vmatpush1.msra.mxu0 0.0
    %338 = vmatprep.subr.mxu0 0.0
    %339 = vmatpush1.msra.mxu0 0.0
    %340 = vmatprep.subr.mxu0 0.0
    %341 = vmatpush1.msra.mxu0 0.0
    %342 = vmatprep.subr.mxu0 0.0
    %343 = vmatpush1.msra.mxu0 0.0
    %344 = vmatprep.subr.mxu0 0.0
    %345 = vmatpush1.msra.mxu0 0.0
    %346 = vmatprep.subr.mxu0 0.0
    %347 = vmatpush1.msra.mxu0 0.0
    %348 = vmatprep.subr.mxu0 0.0
    %349 = vmatpush1.msra.mxu0 0.0
    %350 = vmatprep.subr.mxu0 0.0
    %351 = vmatpush1.msra.mxu0 0.0
    %352 = vmatprep.subr.mxu0 0.0
    %353 = vmatpush1.msra.mxu0 0.0
    %354 = vmatprep.subr.mxu0 0.0
    %355 = vmatpush1.msra.mxu0 0.0
    %356 = vmatprep.subr.mxu0 0.0
    %357 = vmatpush1.msra.mxu0 0.0
    %358 = vmatprep.subr.mxu0 0.0
    %359 = vmatpush1.msra.mxu0 0.0
    %360 = vmatprep.subr.mxu0 0.0
    %361 = vmatpush1.msra.mxu0 0.0
    %362 = vmatprep.mubr.f32.mxu0 0.0
    %363 = vmatmul.mubr.f32.gmra.mrb[0].mxu0 %v270
    %v364 = vpop.f32.mrb[0].mxu0
    %v365 = vadd.f32 %v297, %v364
    %v366 = vpop.f32.mrb[0].mxu0
    %367 = vmatprep.mubr.f32.mxu0 0.0
    %368 = vmatmul.mubr.f32.gmra.mrb[0].mxu0 %v271
    %v369 = vpop.f32.mrb[0].mxu0
    %v370 = vadd.f32 %v297, %v369
    %v371 = vpop.f32.mrb[0].mxu0
    %372 = vmatprep.mubr.f32.mxu0 0.0
    %373 = vmatmul.mubr.f32.gmra.mrb[0].mxu0 %v272
    %v374 = vpop.f32.mrb[0].mxu0
    %v375 = vadd.f32 %v297, %v374
    %v376 = vpop.f32.mrb[0].mxu0
    %377 = vmatprep.mubr.f32.mxu0 0.0
    %378 = vmatmul.mubr.f32.gmra.mrb[0].mxu0 %v273
    %v379 = vpop.f32.mrb[0].mxu0
    %v380 = vadd.f32 %v297, %v379
    %v381 = vpop.f32.mrb[0].mxu0
    %382 = vmatprep.mubr.f32.mxu0 0.0
    %383 = vmatmul.mubr.f32.gmra.mrb[0].mxu0 %v274
    %v384 = vpop.f32.mrb[0].mxu0
    %v385 = vadd.f32 %v297, %v384
    %v386 = vpop.f32.mrb[0].mxu0
    %387 = vmatprep.mubr.f32.mxu0 0.0
    %388 = vmatmul.mubr.f32.gmra.mrb[0].mxu0 %v275
    %v389 = vpop.f32.mrb[0].mxu0
    %v390 = vadd.f32 %v297, %v389
    %v391 = vpop.f32.mrb[0].mxu0
    %392 = vmatprep.mubr.f32.mxu0 0.0
    %393 = vmatmul.mubr.f32.gmra.mrb[0].mxu0 %v276
    %v394 = vpop.f32.mrb[0].mxu0
    %v395 = vadd.f32 %v297, %v394
    %v396 = vpop.f32.mrb[0].mxu0
    %397 = vmatprep.mubr.f32.mxu0 0.0
    %398 = vmatmul.mubr.f32.gmra.mrb[0].mxu0 %v277
    %v399 = vpop.f32.mrb[0].mxu0
    %v400 = vadd.f32 %v297, %v399
    %v401 = vpop.f32.mrb[0].mxu0
    %402 = vdwg.mxu0
    %v403 = vadd.f32 %v365, %v370
    %v404 = vadd.f32 %v403, %v375
    %v405 = vadd.f32 %v404, %v380
    %v406 = vadd.f32 %v405, %v385
    %v407 = vadd.f32 %v406, %v390
    %v408 = vadd.f32 %v407, %v395
    %v409 = vadd.f32 %v408, %v400
    %v410 = vrot.slane %v409, 4
    %v411 = vadd.f32 %v409, %v410
    %v412 = vrot.slane %v411, 2
    %v413 = vadd.f32 %v411, %v412
    %v414 = vrot.slane %v413, 1
    %v415 = vadd.f32 %v413, %v414
    %v416 = vrcp.pop 64.0
    %v417 = vmul.f32 %v415, %v416
    %v418 = vmul.f32 %v365, %v365
    %v419 = vmul.f32 %v370, %v370
    %v420 = vmul.f32 %v375, %v375
    %v421 = vmul.f32 %v380, %v380
    %v422 = vmul.f32 %v385, %v385
    %v423 = vmul.f32 %v390, %v390
    %v424 = vmul.f32 %v395, %v395
    %v425 = vmul.f32 %v400, %v400
    %v426 = vadd.f32 %v418, %v419
    %v427 = vadd.f32 %v426, %v420
    %v428 = vadd.f32 %v427, %v421
    %v429 = vadd.f32 %v428, %v422
    %v430 = vadd.f32 %v429, %v423
    %v431 = vadd.f32 %v430, %v424
    %v432 = vadd.f32 %v431, %v425
    %v433 = vrot.slane %v432, 4
    %v434 = vadd.f32 %v432, %v433
    %v435 = vrot.slane %v434, 2
    %v436 = vadd.f32 %v434, %v435
    %v437 = vrot.slane %v436, 1
    %v438 = vadd.f32 %v436, %v437
    %v439 = vmul.f32 %v438, %v416
    %v440 = vmul.f32 %v417, %v417
    %v441 = vsub.f32 %v439, %v440
    %v442 = vmax.f32 %v441, 0.0
    %v443 = vsub.f32 %v365, %v417
    %v444 = vsub.f32 %v370, %v417
    %v445 = vsub.f32 %v375, %v417
    %v446 = vsub.f32 %v380, %v417
    %v447 = vsub.f32 %v385, %v417
    %v448 = vsub.f32 %v390, %v417
    %v449 = vsub.f32 %v395, %v417
    %v450 = vsub.f32 %v400, %v417
    %v451 = vadd.f32 %v442, 1e-05
    %v452 = vrsqrt.pop %v451
    %v453 = vmul.f32 %v443, %v452
    %v454 = vmul.f32 %v444, %v452
    %v455 = vmul.f32 %v445, %v452
    %v456 = vmul.f32 %v446, %v452
    %v457 = vmul.f32 %v447, %v452
    %v458 = vmul.f32 %v448, %v452
    %v459 = vmul.f32 %v449, %v452
    %v460 = vmul.f32 %v450, %v452
    %v461 = vlaneseq
    %v462 = vshrl.u32 %v461, 7
    %v463 = vsub.s32 1, %v462
    %v464 = vrot.slane %v139, %v463
    %v465 = vmul.f32 %v453, %v464
    %v466 = vmul.f32 %v454, %v464
    %v467 = vmul.f32 %v455, %v464
    %v468 = vmul.f32 %v456, %v464
    %v469 = vmul.f32 %v457, %v464
    %v470 = vmul.f32 %v458, %v464
    %v471 = vmul.f32 %v459, %v464
    %v472 = vmul.f32 %v460, %v464
    %v473 = vlaneseq
    %v474 = vshrl.u32 %v473, 7
    %v475 = vsub.s32 2, %v474
    %v476 = vrot.slane %v139, %v475
    %v477 = vadd.f32 %v465, %v476
    %v478 = vadd.f32 %v466, %v476
    %v479 = vadd.f32 %v467, %v476
    %v480 = vadd.f32 %v468, %v476
    %v481 = vadd.f32 %v469, %v476
    %v482 = vadd.f32 %v470, %v476
    %v483 = vadd.f32 %v471, %v476
    %v484 = vadd.f32 %v472, %v476
    %v485 = vmax.f32 %v477, 0.0
    %v486 = vmax.f32 %v478, 0.0
    %v487 = vmax.f32 %v479, 0.0
    %v488 = vmax.f32 %v480, 0.0
    %v489 = vmax.f32 %v481, 0.0
    %v490 = vmax.f32 %v482, 0.0
    %v491 = vmax.f32 %v483, 0.0
    %v492 = vmax.f32 %v484, 0.0
    %v493 = vld [vmem:[#allocation8] sm:$0xff]
    %v494 = vld [vmem:[#allocation8 + $0x8] sm:$0xff]
    %v495 = vld [vmem:[#allocation8 + $0x10] sm:$0xff]
    %v496 = vld [vmem:[#allocation8 + $0x18] sm:$0xff]
    %v497 = vld [vmem:[#allocation8 + $0x20] sm:$0xff]
    %v498 = vld [vmem:[#allocation8 + $0x28] sm:$0xff]
    %v499 = vld [vmem:[#allocation8 + $0x30] sm:$0xff]
    %v500 = vld [vmem:[#allocation8 + $0x38] sm:$0xff]
    %v501 = vld [vmem:[#allocation8 + $0x40] sm:$0xff]
    %v502 = vld [vmem:[#allocation8 + $0x48] sm:$0xff]
    %v503 = vld [vmem:[#allocation8 + $0x50] sm:$0xff]
    %v504 = vld [vmem:[#allocation8 + $0x58] sm:$0xff]
    %v505 = vld [vmem:[#allocation8 + $0x60] sm:$0xff]
    %v506 = vld [vmem:[#allocation8 + $0x68] sm:$0xff]
    %v507 = vld [vmem:[#allocation8 + $0x70] sm:$0xff]
    %v508 = vld [vmem:[#allocation8 + $0x78] sm:$0xff]
    %v509 = vlaneseq
    %v510 = vshrl.u32 %v509, 7
    %v511 = vsub.s32 3, %v510
    %v512 = vrot.slane %v139, %v511
    %513 = vmatprep.subr.mxu0 0.0
    %514 = vmatpush1.msra.mxu0 %v493
    %515 = vmatprep.subr.mxu0 0.0
    %516 = vmatpush1.msra.mxu0 %v494
    %517 = vmatprep.subr.mxu0 0.0
    %518 = vmatpush1.msra.mxu0 %v495
    %519 = vmatprep.subr.mxu0 0.0
    %520 = vmatpush1.msra.mxu0 %v496
    %521 = vmatprep.subr.mxu0 0.0
    %522 = vmatpush1.msra.mxu0 %v497
    %523 = vmatprep.subr.mxu0 0.0
    %524 = vmatpush1.msra.mxu0 %v498
    %525 = vmatprep.subr.mxu0 0.0
    %526 = vmatpush1.msra.mxu0 %v499
    %527 = vmatprep.subr.mxu0 0.0
    %528 = vmatpush1.msra.mxu0 %v500
    %529 = vmatprep.subr.mxu0 0.0
    %530 = vmatpush1.msra.mxu0 %v501
    %531 = vmatprep.subr.mxu0 0.0
    %532 = vmatpush1.msra.mxu0 %v502
    %533 = vmatprep.subr.mxu0 0.0
    %534 = vmatpush1.msra.mxu0 %v503
    %535 = vmatprep.subr.mxu0 0.0
    %536 = vmatpush1.msra.mxu0 %v504
    %537 = vmatprep.subr.mxu0 0.0
    %538 = vmatpush1.msra.mxu0 %v505
    %539 = vmatprep.subr.mxu0 0.0
    %540 = vmatpush1.msra.mxu0 %v506
    %541 = vmatprep.subr.mxu0 0.0
    %542 = vmatpush1.msra.mxu0 %v507
    %543 = vmatprep.subr.mxu0 0.0
    %544 = vmatpush1.msra.mxu0 %v508
    %545 = vmatprep.subr.mxu0 0.0
    %546 = vmatpush1.msra.mxu0 0.0
    %547 = vmatprep.subr.mxu0 0.0
    %548 = vmatpush1.msra.mxu0 0.0
    %549 = vmatprep.subr.mxu0 0.0
    %550 = vmatpush1.msra.mxu0 0.0
    %551 = vmatprep.subr.mxu0 0.0
    %552 = vmatpush1.msra.mxu0 0.0
    %553 = vmatprep.subr.mxu0 0.0
    %554 = vmatpush1.msra.mxu0 0.0
    %555 = vmatprep.subr.mxu0 0.0
    %556 = vmatpush1.msra.mxu0 0.0
    %557 = vmatprep.subr.mxu0 0.0
    %558 = vmatpush1.msra.mxu0 0.0
    %559 = vmatprep.subr.mxu0 0.0
    %560 = vmatpush1.msra.mxu0 0.0
    %561 = vmatprep.subr.mxu0 0.0
    %562 = vmatpush1.msra.mxu0 0.0
    %563 = vmatprep.subr.mxu0 0.0
    %564 = vmatpush1.msra.mxu0 0.0
    %565 = vmatprep.subr.mxu0 0.0
    %566 = vmatpush1.msra.mxu0 0.0
    %567 = vmatprep.subr.mxu0 0.0
    %568 = vmatpush1.msra.mxu0 0.0
    %569 = vmatprep.subr.mxu0 0.0
    %570 = vmatpush1.msra.mxu0 0.0
    %571 = vmatprep.subr.mxu0 0.0
    %572 = vmatpush1.msra.mxu0 0.0
    %573 = vmatprep.subr.mxu0 0.0
    %574 = vmatpush1.msra.mxu0 0.0
    %575 = vmatprep.subr.mxu0 0.0
    %576 = vmatpush1.msra.mxu0 0.0
    %577 = vmatprep.mubr.f32.mxu0 0.0
    %578 = vmatmul.mubr.f32.gmra.mrb[0].mxu0 %v485
    %v579 = vpop.f32.mrb[0].mxu0
    %v580 = vadd.f32 %v512, %v579
    %v581 = vpop.f32.mrb[0].mxu0
    %582 = vmatprep.mubr.f32.mxu0 0.0
    %583 = vmatmul.mubr.f32.gmra.mrb[0].mxu0 %v486
    %v584 = vpop.f32.mrb[0].mxu0
    %v585 = vadd.f32 %v512, %v584
    %v586 = vpop.f32.mrb[0].mxu0
    %587 = vmatprep.mubr.f32.mxu0 0.0
    %588 = vmatmul.mubr.f32.gmra.mrb[0].mxu0 %v487
    %v589 = vpop.f32.mrb[0].mxu0
    %v590 = vadd.f32 %v512, %v589
    %v591 = vpop.f32.mrb[0].mxu0
    %592 = vmatprep.mubr.f32.mxu0 0.0
    %593 = vmatmul.mubr.f32.gmra.mrb[0].mxu0 %v488
    %v594 = vpop.f32.mrb[0].mxu0
    %v595 = vadd.f32 %v512, %v594
    %v596 = vpop.f32.mrb[0].mxu0
    %597 = vmatprep.mubr.f32.mxu0 0.0
    %598 = vmatmul.mubr.f32.gmra.mrb[0].mxu0 %v489
    %v599 = vpop.f32.mrb[0].mxu0
    %v600 = vadd.f32 %v512, %v599
    %v601 = vpop.f32.mrb[0].mxu0
    %602 = vmatprep.mubr.f32.mxu0 0.0
    %603 = vmatmul.mubr.f32.gmra.mrb[0].mxu0 %v490
    %v604 = vpop.f32.mrb[0].mxu0
    %v605 = vadd.f32 %v512, %v604
    %v606 = vpop.f32.mrb[0].mxu0
    %607 = vmatprep.mubr.f32.mxu0 0.0
    %608 = vmatmul.mubr.f32.gmra.mrb[0].mxu0 %v491
    %v609 = vpop.f32.mrb[0].mxu0
    %v610 = vadd.f32 %v512, %v609
    %v611 = vpop.f32.mrb[0].mxu0
    %612 = vmatprep.mubr.f32.mxu0 0.0
    %613 = vmatmul.mubr.f32.gmra.mrb[0].mxu0 %v492
    %v614 = vpop.f32.mrb[0].mxu0
    %v615 = vadd.f32 %v512, %v614
    %v616 = vpop.f32.mrb[0].mxu0
    %617 = vdwg.mxu0
    %v618 = vadd.f32 %v580, %v585
    %v619 = vadd.f32 %v618, %v590
    %v620 = vadd.f32 %v619, %v595
    %v621 = vadd.f32 %v620, %v600
    %v622 = vadd.f32 %v621, %v605
    %v623 = vadd.f32 %v622, %v610
    %v624 = vadd.f32 %v623, %v615
    %v625 = vrot.slane %v624, 4
    %v626 = vadd.f32 %v624, %v625
    %v627 = vrot.slane %v626, 2
    %v628 = vadd.f32 %v626, %v627
    %v629 = vrot.slane %v628, 1
    %v630 = vadd.f32 %v628, %v629
    %v631 = vmul.f32 %v630, %v416
    %v632 = vmul.f32 %v580, %v580
    %v633 = vmul.f32 %v585, %v585
    %v634 = vmul.f32 %v590, %v590
    %v635 = vmul.f32 %v595, %v595
    %v636 = vmul.f32 %v600, %v600
    %v637 = vmul.f32 %v605, %v605
    %v638 = vmul.f32 %v610, %v610
    %v639 = vmul.f32 %v615, %v615
    %v640 = vadd.f32 %v632, %v633
    %v641 = vadd.f32 %v640, %v634
    %v642 = vadd.f32 %v641, %v635
    %v643 = vadd.f32 %v642, %v636
    %v644 = vadd.f32 %v643, %v637
    %v645 = vadd.f32 %v644, %v638
    %v646 = vadd.f32 %v645, %v639
    %v647 = vrot.slane %v646, 4
    %v648 = vadd.f32 %v646, %v647
    %v649 = vrot.slane %v648, 2
    %v650 = vadd.f32 %v648, %v649
    %v651 = vrot.slane %v650, 1
    %v652 = vadd.f32 %v650, %v651
    %v653 = vmul.f32 %v652, %v416
    %v654 = vmul.f32 %v631, %v631
    %v655 = vsub.f32 %v653, %v654
    %v656 = vmax.f32 %v655, 0.0
    %v657 = vsub.f32 %v580, %v631
    %v658 = vsub.f32 %v585, %v631
    %v659 = vsub.f32 %v590, %v631
    %v660 = vsub.f32 %v595, %v631
    %v661 = vsub.f32 %v600, %v631
    %v662 = vsub.f32 %v605, %v631
    %v663 = vsub.f32 %v610, %v631
    %v664 = vsub.f32 %v615, %v631
    %v665 = vadd.f32 %v656, 1e-05
    %v666 = vrsqrt.pop %v665
    %v667 = vmul.f32 %v657, %v666
    %v668 = vmul.f32 %v658, %v666
    %v669 = vmul.f32 %v659, %v666
    %v670 = vmul.f32 %v660, %v666
    %v671 = vmul.f32 %v661, %v666
    %v672 = vmul.f32 %v662, %v666
    %v673 = vmul.f32 %v663, %v666
    %v674 = vmul.f32 %v664, %v666
    %v675 = vlaneseq
    %v676 = vshrl.u32 %v675, 7
    %v677 = vsub.s32 4, %v676
    %v678 = vrot.slane %v139, %v677
    %v679 = vmul.f32 %v667, %v678
    %v680 = vmul.f32 %v668, %v678
    %v681 = vmul.f32 %v669, %v678
    %v682 = vmul.f32 %v670, %v678
    %v683 = vmul.f32 %v671, %v678
    %v684 = vmul.f32 %v672, %v678
    %v685 = vmul.f32 %v673, %v678
    %v686 = vmul.f32 %v674, %v678
    %v687 = vlaneseq
    %v688 = vshrl.u32 %v687, 7
    %v689 = vsub.s32 5, %v688
    %v690 = vrot.slane %v139, %v689
    %v691 = vadd.f32 %v679, %v690
    %v692 = vadd.f32 %v680, %v690
    %v693 = vadd.f32 %v681, %v690
    %v694 = vadd.f32 %v682, %v690
    %v695 = vadd.f32 %v683, %v690
    %v696 = vadd.f32 %v684, %v690
    %v697 = vadd.f32 %v685, %v690
    %v698 = vadd.f32 %v686, %v690
    %v699 = vmax.f32 %v691, 0.0
    %v700 = vmax.f32 %v692, 0.0
    %v701 = vmax.f32 %v693, 0.0
    %v702 = vmax.f32 %v694, 0.0
    %v703 = vmax.f32 %v695, 0.0
    %v704 = vmax.f32 %v696, 0.0
    %v705 = vmax.f32 %v697, 0.0
    %v706 = vmax.f32 %v698, 0.0
    %v707 = vadd.f32 %v699, %v700
    %v708 = vadd.f32 %v707, %v701
    %v709 = vadd.f32 %v708, %v702
    %v710 = vadd.f32 %v709, %v703
    %v711 = vadd.f32 %v710, %v704
    %v712 = vadd.f32 %v711, %v705
    %v713 = vadd.f32 %v712, %v706
    %v714 = vrot.slane %v713, 4
    %v715 = vadd.f32 %v713, %v714
    %v716 = vrot.slane %v715, 2
    %v717 = vadd.f32 %v715, %v716
    %v718 = vrot.slane %v717, 1
    %v719 = vadd.f32 %v717, %v718
    %v720 = vmul.f32 %v719, %v416
    %v721 = vmul.f32 %v699, %v699
    %v722 = vmul.f32 %v700, %v700
    %v723 = vmul.f32 %v701, %v701
    %v724 = vmul.f32 %v702, %v702
    %v725 = vmul.f32 %v703, %v703
    %v726 = vmul.f32 %v704, %v704
    %v727 = vmul.f32 %v705, %v705
    %v728 = vmul.f32 %v706, %v706
    %v729 = vadd.f32 %v721, %v722
    %v730 = vadd.f32 %v729, %v723
    %v731 = vadd.f32 %v730, %v724
    %v732 = vadd.f32 %v731, %v725
    %v733 = vadd.f32 %v732, %v726
    %v734 = vadd.f32 %v733, %v727
    %v735 = vadd.f32 %v734, %v728
    %v736 = vrot.slane %v735, 4
    %v737 = vadd.f32 %v735, %v736
    %v738 = vrot.slane %v737, 2
    %v739 = vadd.f32 %v737, %v738
    %v740 = vrot.slane %v739, 1
    %v741 = vadd.f32 %v739, %v740
    %v742 = vmul.f32 %v741, %v416
    %v743 = vmul.f32 %v720, %v720
    %v744 = vsub.f32 %v742, %v743
    %v745 = vmax.f32 %v744, 0.0
    %v746 = vsub.f32 %v699, %v720
    %v747 = vsub.f32 %v700, %v720
    %v748 = vsub.f32 %v701, %v720
    %v749 = vsub.f32 %v702, %v720
    %v750 = vsub.f32 %v703, %v720
    %v751 = vsub.f32 %v704, %v720
    %v752 = vsub.f32 %v705, %v720
    %v753 = vsub.f32 %v706, %v720
    %v754 = vadd.f32 %v745, 1e-05
    %v755 = vrsqrt.pop %v754
    %v756 = vmul.f32 %v746, %v755
    %v757 = vmul.f32 %v747, %v755
    %v758 = vmul.f32 %v748, %v755
    %v759 = vmul.f32 %v749, %v755
    %v760 = vmul.f32 %v750, %v755
    %v761 = vmul.f32 %v751, %v755
    %v762 = vmul.f32 %v752, %v755
    %v763 = vmul.f32 %v753, %v755
    %v764 = vlaneseq
    %v765 = vshrl.u32 %v764, 7
    %v766 = vsub.s32 6, %v765
    %v767 = vrot.slane %v139, %v766
    %v768 = vmul.f32 %v756, %v767
    %v769 = vmul.f32 %v757, %v767
    %v770 = vmul.f32 %v758, %v767
    %v771 = vmul.f32 %v759, %v767
    %v772 = vmul.f32 %v760, %v767
    %v773 = vmul.f32 %v761, %v767
    %v774 = vmul.f32 %v762, %v767
    %v775 = vmul.f32 %v763, %v767
    %v776 = vlaneseq
    %v777 = vshrl.u32 %v776, 7
    %v778 = vsub.s32 7, %v777
    %v779 = vrot.slane %v139, %v778
    %v780 = vadd.f32 %v768, %v779
    %v781 = vadd.f32 %v769, %v779
    %v782 = vadd.f32 %v770, %v779
    %v783 = vadd.f32 %v771, %v779
    %v784 = vadd.f32 %v772, %v779
    %v785 = vadd.f32 %v773, %v779
    %v786 = vadd.f32 %v774, %v779
    %v787 = vadd.f32 %v775, %v779
    %v788 = vmax.f32 %v780, 0.0
    %v789 = vmax.f32 %v781, 0.0
    %v790 = vmax.f32 %v782, 0.0
    %v791 = vmax.f32 %v783, 0.0
    %v792 = vmax.f32 %v784, 0.0
    %v793 = vmax.f32 %v785, 0.0
    %v794 = vmax.f32 %v786, 0.0
    %v795 = vmax.f32 %v787, 0.0
    %796 = vst [vmem:[#allocation13] sm:$0xff] %v788
    %797 = vst [vmem:[#allocation13 + $0x8] sm:$0xff] %v789
    %798 = vst [vmem:[#allocation13 + $0x10] sm:$0xff] %v790
    %799 = vst [vmem:[#allocation13 + $0x18] sm:$0xff] %v791
    %800 = vst [vmem:[#allocation13 + $0x20] sm:$0xff] %v792
    %801 = vst [vmem:[#allocation13 + $0x28] sm:$0xff] %v793
    %802 = vst [vmem:[#allocation13 + $0x30] sm:$0xff] %v794
    %803 = vst [vmem:[#allocation13 + $0x38] sm:$0xff] %v795
    %v804 = vld [vmem:[%s7] sm:$0xff]
    %805 = vmatprep.subr.mxu0 0.0
    %806 = vmatpush1.msra.mxu0 %v788
    %807 = vmatprep.subr.mxu0 0.0
    %808 = vmatpush1.msra.mxu0 %v789
    %809 = vmatprep.subr.mxu0 0.0
    %810 = vmatpush1.msra.mxu0 %v790
    %811 = vmatprep.subr.mxu0 0.0
    %812 = vmatpush1.msra.mxu0 %v791
    %813 = vmatprep.subr.mxu0 0.0
    %814 = vmatpush1.msra.mxu0 %v792
    %815 = vmatprep.subr.mxu0 0.0
    %816 = vmatpush1.msra.mxu0 %v793
    %817 = vmatprep.subr.mxu0 0.0
    %818 = vmatpush1.msra.mxu0 %v794
    %819 = vmatprep.subr.mxu0 0.0
    %820 = vmatpush1.msra.mxu0 %v795
    %821 = vmatprep.subr.mxu0 0.0
    %822 = vmatpush1.msra.mxu0 0.0
    %823 = vmatprep.subr.mxu0 0.0
    %824 = vmatpush1.msra.mxu0 0.0
    %825 = vmatprep.subr.mxu0 0.0
    %826 = vmatpush1.msra.mxu0 0.0
    %827 = vmatprep.subr.mxu0 0.0
    %828 = vmatpush1.msra.mxu0 0.0
    %829 = vmatprep.subr.mxu0 0.0
    %830 = vmatpush1.msra.mxu0 0.0
    %831 = vmatprep.subr.mxu0 0.0
    %832 = vmatpush1.msra.mxu0 0.0
    %833 = vmatprep.subr.mxu0 0.0
    %834 = vmatpush1.msra.mxu0 0.0
    %835 = vmatprep.subr.mxu0 0.0
    %836 = vmatpush1.msra.mxu0 0.0
    %837 = vmatprep.subr.mxu0 0.0
    %838 = vmatpush1.msra.mxu0 0.0
    %839 = vmatprep.subr.mxu0 0.0
    %840 = vmatpush1.msra.mxu0 0.0
    %841 = vmatprep.subr.mxu0 0.0
    %842 = vmatpush1.msra.mxu0 0.0
    %843 = vmatprep.subr.mxu0 0.0
    %844 = vmatpush1.msra.mxu0 0.0
    %845 = vmatprep.subr.mxu0 0.0
    %846 = vmatpush1.msra.mxu0 0.0
    %847 = vmatprep.subr.mxu0 0.0
    %848 = vmatpush1.msra.mxu0 0.0
    %849 = vmatprep.subr.mxu0 0.0
    %850 = vmatpush1.msra.mxu0 0.0
    %851 = vmatprep.subr.mxu0 0.0
    %852 = vmatpush1.msra.mxu0 0.0
    %853 = vmatprep.subr.mxu0 0.0
    %854 = vmatpush1.msra.mxu0 0.0
    %855 = vmatprep.subr.mxu0 0.0
    %856 = vmatpush1.msra.mxu0 0.0
    %857 = vmatprep.subr.mxu0 0.0
    %858 = vmatpush1.msra.mxu0 0.0
    %859 = vmatprep.subr.mxu0 0.0
    %860 = vmatpush1.msra.mxu0 0.0
    %861 = vmatprep.subr.mxu0 0.0
    %862 = vmatpush1.msra.mxu0 0.0
    %863 = vmatprep.subr.mxu0 0.0
    %864 = vmatpush1.msra.mxu0 0.0
    %865 = vmatprep.subr.mxu0 0.0
    %866 = vmatpush1.msra.mxu0 0.0
    %867 = vmatprep.subr.mxu0 0.0
    %868 = vmatpush1.msra.mxu0 0.0
    %869 = vmatprep.mubr.f32.mxu0 0.0
    %870 = vmatmul.mubr.f32.gmra.mrb[0].mxu0 %v142
    %v871 = vpop.f32.mrb[0].mxu0
    %v872 = vadd.f32 0.0, %v871
    %v873 = vpop.f32.mrb[0].mxu0
    %874 = vmatprep.mubr.f32.mxu0 0.0
    %875 = vmatmul.mubr.f32.gmra.mrb[0].mxu0 %v145
    %v876 = vpop.f32.mrb[0].mxu0
    %v877 = vadd.f32 0.0, %v876
    %v878 = vpop.f32.mrb[0].mxu0
    %879 = vmatprep.mubr.f32.mxu0 0.0
    %880 = vmatmul.mubr.f32.gmra.mrb[0].mxu0 %v148
    %v881 = vpop.f32.mrb[0].mxu0
    %v882 = vadd.f32 0.0, %v881
    %v883 = vpop.f32.mrb[0].mxu0
    %884 = vmatprep.mubr.f32.mxu0 0.0
    %885 = vmatmul.mubr.f32.gmra.mrb[0].mxu0 %v151
    %v886 = vpop.f32.mrb[0].mxu0
    %v887 = vadd.f32 0.0, %v886
    %v888 = vpop.f32.mrb[0].mxu0
    %889 = vmatprep.mubr.f32.mxu0 0.0
    %890 = vmatmul.mubr.f32.gmra.mrb[0].mxu0 %v154
    %v891 = vpop.f32.mrb[0].mxu0
    %v892 = vadd.f32 0.0, %v891
    %v893 = vpop.f32.mrb[0].mxu0
    %894 = vmatprep.mubr.f32.mxu0 0.0
    %895 = vmatmul.mubr.f32.gmra.mrb[0].mxu0 %v157
    %v896 = vpop.f32.mrb[0].mxu0
    %v897 = vadd.f32 0.0, %v896
    %v898 = vpop.f32.mrb[0].mxu0
    %899 = vmatprep.mubr.f32.mxu0 0.0
    %900 = vmatmul.mubr.f32.gmra.mrb[0].mxu0 %v160
    %v901 = vpop.f32.mrb[0].mxu0
    %v902 = vadd.f32 0.0, %v901
    %v903 = vpop.f32.mrb[0].mxu0
    %904 = vmatprep.mubr.f32.mxu0 0.0
    %905 = vmatmul.mubr.f32.gmra.mrb[0].mxu0 %v163
    %v906 = vpop.f32.mrb[0].mxu0
    %v907 = vadd.f32 0.0, %v906
    %v908 = vpop.f32.mrb[0].mxu0
    %909 = vdwg.mxu0
    %v910 = vadd.f32 %v788, %v872
    %v911 = vadd.f32 %v789, %v877
    %v912 = vadd.f32 %v790, %v882
    %v913 = vadd.f32 %v791, %v887
    %v914 = vadd.f32 %v792, %v892
    %v915 = vadd.f32 %v793, %v897
    %v916 = vadd.f32 %v794, %v902
    %v917 = vadd.f32 %v795, %v907
    %v918 = vld [vmem:[#allocation10] sm:$0xff]
    %v919 = vld [vmem:[#allocation10 + $0x8] sm:$0xff]
    %v920 = vld [vmem:[#allocation10 + $0x10] sm:$0xff]
    %v921 = vld [vmem:[#allocation10 + $0x18] sm:$0xff]
    %v922 = vld [vmem:[#allocation10 + $0x20] sm:$0xff]
    %v923 = vld [vmem:[#allocation10 + $0x28] sm:$0xff]
    %v924 = vld [vmem:[#allocation10 + $0x30] sm:$0xff]
    %v925 = vld [vmem:[#allocation10 + $0x38] sm:$0xff]
    %v926 = vld [vmem:[#allocation10 + $0x40] sm:$0xff]
    %v927 = vld [vmem:[#allocation10 + $0x48] sm:$0xff]
    %v928 = vld [vmem:[#allocation10 + $0x50] sm:$0xff]
    %v929 = vld [vmem:[#allocation10 + $0x58] sm:$0xff]
    %v930 = vld [vmem:[#allocation10 + $0x60] sm:$0xff]
    %v931 = vld [vmem:[#allocation10 + $0x68] sm:$0xff]
    %v932 = vld [vmem:[#allocation10 + $0x70] sm:$0xff]
    %v933 = vld [vmem:[#allocation10 + $0x78] sm:$0xff]
    %v934 = vlaneseq
    %v935 = vshrl.u32 %v934, 7
    %v936 = vsub.s32 0, %v935
    %v937 = vrot.slane %v804, %v936
    %938 = vmatprep.subr.mxu0 0.0
    %939 = vmatpush1.msra.mxu0 %v918
    %940 = vmatprep.subr.mxu0 0.0
    %941 = vmatpush1.msra.mxu0 %v919
    %942 = vmatprep.subr.mxu0 0.0
    %943 = vmatpush1.msra.mxu0 %v920
    %944 = vmatprep.subr.mxu0 0.0
    %945 = vmatpush1.msra.mxu0 %v921
    %946 = vmatprep.subr.mxu0 0.0
    %947 = vmatpush1.msra.mxu0 %v922
    %948 = vmatprep.subr.mxu0 0.0
    %949 = vmatpush1.msra.mxu0 %v923
    %950 = vmatprep.subr.mxu0 0.0
    %951 = vmatpush1.msra.mxu0 %v924
    %952 = vmatprep.subr.mxu0 0.0
    %953 = vmatpush1.msra.mxu0 %v925
    %954 = vmatprep.subr.mxu0 0.0
    %955 = vmatpush1.msra.mxu0 %v926
    %956 = vmatprep.subr.mxu0 0.0
    %957 = vmatpush1.msra.mxu0 %v927
    %958 = vmatprep.subr.mxu0 0.0
    %959 = vmatpush1.msra.mxu0 %v928
    %960 = vmatprep.subr.mxu0 0.0
    %961 = vmatpush1.msra.mxu0 %v929
    %962 = vmatprep.subr.mxu0 0.0
    %963 = vmatpush1.msra.mxu0 %v930
    %964 = vmatprep.subr.mxu0 0.0
    %965 = vmatpush1.msra.mxu0 %v931
    %966 = vmatprep.subr.mxu0 0.0
    %967 = vmatpush1.msra.mxu0 %v932
    %968 = vmatprep.subr.mxu0 0.0
    %969 = vmatpush1.msra.mxu0 %v933
    %970 = vmatprep.subr.mxu0 0.0
    %971 = vmatpush1.msra.mxu0 0.0
    %972 = vmatprep.subr.mxu0 0.0
    %973 = vmatpush1.msra.mxu0 0.0
    %974 = vmatprep.subr.mxu0 0.0
    %975 = vmatpush1.msra.mxu0 0.0
    %976 = vmatprep.subr.mxu0 0.0
    %977 = vmatpush1.msra.mxu0 0.0
    %978 = vmatprep.subr.mxu0 0.0
    %979 = vmatpush1.msra.mxu0 0.0
    %980 = vmatprep.subr.mxu0 0.0
    %981 = vmatpush1.msra.mxu0 0.0
    %982 = vmatprep.subr.mxu0 0.0
    %983 = vmatpush1.msra.mxu0 0.0
    %984 = vmatprep.subr.mxu0 0.0
    %985 = vmatpush1.msra.mxu0 0.0
    %986 = vmatprep.subr.mxu0 0.0
    %987 = vmatpush1.msra.mxu0 0.0
    %988 = vmatprep.subr.mxu0 0.0
    %989 = vmatpush1.msra.mxu0 0.0
    %990 = vmatprep.subr.mxu0 0.0
    %991 = vmatpush1.msra.mxu0 0.0
    %992 = vmatprep.subr.mxu0 0.0
    %993 = vmatpush1.msra.mxu0 0.0
    %994 = vmatprep.subr.mxu0 0.0
    %995 = vmatpush1.msra.mxu0 0.0
    %996 = vmatprep.subr.mxu0 0.0
    %997 = vmatpush1.msra.mxu0 0.0
    %998 = vmatprep.subr.mxu0 0.0
    %999 = vmatpush1.msra.mxu0 0.0
    %1000 = vmatprep.subr.mxu0 0.0
    %1001 = vmatpush1.msra.mxu0 0.0
    %1002 = vmatprep.mubr.f32.mxu0 0.0
    %1003 = vmatmul.mubr.f32.gmra.mrb[0].mxu0 %v910
    %v1004 = vpop.f32.mrb[0].mxu0
    %v1005 = vadd.f32 %v937, %v1004
    %v1006 = vpop.f32.mrb[0].mxu0
    %1007 = vmatprep.mubr.f32.mxu0 0.0
    %1008 = vmatmul.mubr.f32.gmra.mrb[0].mxu0 %v911
    %v1009 = vpop.f32.mrb[0].mxu0
    %v1010 = vadd.f32 %v937, %v1009
    %v1011 = vpop.f32.mrb[0].mxu0
    %1012 = vmatprep.mubr.f32.mxu0 0.0
    %1013 = vmatmul.mubr.f32.gmra.mrb[0].mxu0 %v912
    %v1014 = vpop.f32.mrb[0].mxu0
    %v1015 = vadd.f32 %v937, %v1014
    %v1016 = vpop.f32.mrb[0].mxu0
    %1017 = vmatprep.mubr.f32.mxu0 0.0
    %1018 = vmatmul.mubr.f32.gmra.mrb[0].mxu0 %v913
    %v1019 = vpop.f32.mrb[0].mxu0
    %v1020 = vadd.f32 %v937, %v1019
    %v1021 = vpop.f32.mrb[0].mxu0
    %1022 = vmatprep.mubr.f32.mxu0 0.0
    %1023 = vmatmul.mubr.f32.gmra.mrb[0].mxu0 %v914
    %v1024 = vpop.f32.mrb[0].mxu0
    %v1025 = vadd.f32 %v937, %v1024
    %v1026 = vpop.f32.mrb[0].mxu0
    %1027 = vmatprep.mubr.f32.mxu0 0.0
    %1028 = vmatmul.mubr.f32.gmra.mrb[0].mxu0 %v915
    %v1029 = vpop.f32.mrb[0].mxu0
    %v1030 = vadd.f32 %v937, %v1029
    %v1031 = vpop.f32.mrb[0].mxu0
    %1032 = vmatprep.mubr.f32.mxu0 0.0
    %1033 = vmatmul.mubr.f32.gmra.mrb[0].mxu0 %v916
    %v1034 = vpop.f32.mrb[0].mxu0
    %v1035 = vadd.f32 %v937, %v1034
    %v1036 = vpop.f32.mrb[0].mxu0
    %1037 = vmatprep.mubr.f32.mxu0 0.0
    %1038 = vmatmul.mubr.f32.gmra.mrb[0].mxu0 %v917
    %v1039 = vpop.f32.mrb[0].mxu0
    %v1040 = vadd.f32 %v937, %v1039
    %v1041 = vpop.f32.mrb[0].mxu0
    %1042 = vdwg.mxu0
    %v1043 = vadd.f32 %v1005, %v1010
    %v1044 = vadd.f32 %v1043, %v1015
    %v1045 = vadd.f32 %v1044, %v1020
    %v1046 = vadd.f32 %v1045, %v1025
    %v1047 = vadd.f32 %v1046, %v1030
    %v1048 = vadd.f32 %v1047, %v1035
    %v1049 = vadd.f32 %v1048, %v1040
    %v1050 = vrot.slane %v1049, 4
    %v1051 = vadd.f32 %v1049, %v1050
    %v1052 = vrot.slane %v1051, 2
    %v1053 = vadd.f32 %v1051, %v1052
    %v1054 = vrot.slane %v1053, 1
    %v1055 = vadd.f32 %v1053, %v1054
    %v1056 = vmul.f32 %v1055, %v416
    %v1057 = vmul.f32 %v1005, %v1005
    %v1058 = vmul.f32 %v1010, %v1010
    %v1059 = vmul.f32 %v1015, %v1015
    %v1060 = vmul.f32 %v1020, %v1020
    %v1061 = vmul.f32 %v1025, %v1025
    %v1062 = vmul.f32 %v1030, %v1030
    %v1063 = vmul.f32 %v1035, %v1035
    %v1064 = vmul.f32 %v1040, %v1040
    %v1065 = vadd.f32 %v1057, %v1058
    %v1066 = vadd.f32 %v1065, %v1059
    %v1067 = vadd.f32 %v1066, %v1060
    %v1068 = vadd.f32 %v1067, %v1061
    %v1069 = vadd.f32 %v1068, %v1062
    %v1070 = vadd.f32 %v1069, %v1063
    %v1071 = vadd.f32 %v1070, %v1064
    %v1072 = vrot.slane %v1071, 4
    %v1073 = vadd.f32 %v1071, %v1072
    %v1074 = vrot.slane %v1073, 2
    %v1075 = vadd.f32 %v1073, %v1074
    %v1076 = vrot.slane %v1075, 1
    %v1077 = vadd.f32 %v1075, %v1076
    %v1078 = vmul.f32 %v1077, %v416
    %v1079 = vmul.f32 %v1056, %v1056
    %v1080 = vsub.f32 %v1078, %v1079
    %v1081 = vmax.f32 %v1080, 0.0
    %v1082 = vsub.f32 %v1005, %v1056
    %v1083 = vsub.f32 %v1010, %v1056
    %v1084 = vsub.f32 %v1015, %v1056
    %v1085 = vsub.f32 %v1020, %v1056
    %v1086 = vsub.f32 %v1025, %v1056
    %v1087 = vsub.f32 %v1030, %v1056
    %v1088 = vsub.f32 %v1035, %v1056
    %v1089 = vsub.f32 %v1040, %v1056
    %v1090 = vadd.f32 %v1081, 1e-05
    %v1091 = vrsqrt.pop %v1090
    %v1092 = vmul.f32 %v1082, %v1091
    %v1093 = vmul.f32 %v1083, %v1091
    %v1094 = vmul.f32 %v1084, %v1091
    %v1095 = vmul.f32 %v1085, %v1091
    %v1096 = vmul.f32 %v1086, %v1091
    %v1097 = vmul.f32 %v1087, %v1091
    %v1098 = vmul.f32 %v1088, %v1091
    %v1099 = vmul.f32 %v1089, %v1091
    %v1100 = vlaneseq
    %v1101 = vshrl.u32 %v1100, 7
    %v1102 = vsub.s32 1, %v1101
    %v1103 = vrot.slane %v804, %v1102
    %v1104 = vmul.f32 %v1092, %v1103
    %v1105 = vmul.f32 %v1093, %v1103
    %v1106 = vmul.f32 %v1094, %v1103
    %v1107 = vmul.f32 %v1095, %v1103
    %v1108 = vmul.f32 %v1096, %v1103
    %v1109 = vmul.f32 %v1097, %v1103
    %v1110 = vmul.f32 %v1098, %v1103
    %v1111 = vmul.f32 %v1099, %v1103
    %v1112 = vlaneseq
    %v1113 = vshrl.u32 %v1112, 7
    %v1114 = vsub.s32 2, %v1113
    %v1115 = vrot.slane %v804, %v1114
    %v1116 = vadd.f32 %v1104, %v1115
    %v1117 = vadd.f32 %v1105, %v1115
    %v1118 = vadd.f32 %v1106, %v1115
    %v1119 = vadd.f32 %v1107, %v1115
    %v1120 = vadd.f32 %v1108, %v1115
    %v1121 = vadd.f32 %v1109, %v1115
    %v1122 = vadd.f32 %v1110, %v1115
    %v1123 = vadd.f32 %v1111, %v1115
    %v1124 = vmax.f32 %v1116, 0.0
    %v1125 = vmax.f32 %v1117, 0.0
    %v1126 = vmax.f32 %v1118, 0.0
    %v1127 = vmax.f32 %v1119, 0.0
    %v1128 = vmax.f32 %v1120, 0.0
    %v1129 = vmax.f32 %v1121, 0.0
    %v1130 = vmax.f32 %v1122, 0.0
    %v1131 = vmax.f32 %v1123, 0.0
    %v1132 = vld [vmem:[#allocation11] sm:$0xff]
    %v1133 = vld [vmem:[#allocation11 + $0x8] sm:$0xff]
    %v1134 = vld [vmem:[#allocation11 + $0x10] sm:$0xff]
    %v1135 = vld [vmem:[#allocation11 + $0x18] sm:$0xff]
    %v1136 = vld [vmem:[#allocation11 + $0x20] sm:$0xff]
    %v1137 = vld [vmem:[#allocation11 + $0x28] sm:$0xff]
    %v1138 = vld [vmem:[#allocation11 + $0x30] sm:$0xff]
    %v1139 = vld [vmem:[#allocation11 + $0x38] sm:$0xff]
    %v1140 = vld [vmem:[#allocation11 + $0x40] sm:$0xff]
    %v1141 = vld [vmem:[#allocation11 + $0x48] sm:$0xff]
    %v1142 = vld [vmem:[#allocation11 + $0x50] sm:$0xff]
    %v1143 = vld [vmem:[#allocation11 + $0x58] sm:$0xff]
    %v1144 = vld [vmem:[#allocation11 + $0x60] sm:$0xff]
    %v1145 = vld [vmem:[#allocation11 + $0x68] sm:$0xff]
    %v1146 = vld [vmem:[#allocation11 + $0x70] sm:$0xff]
    %v1147 = vld [vmem:[#allocation11 + $0x78] sm:$0xff]
    %v1148 = vlaneseq
    %v1149 = vshrl.u32 %v1148, 7
    %v1150 = vsub.s32 3, %v1149
    %v1151 = vrot.slane %v804, %v1150
    %1152 = vmatprep.subr.mxu0 0.0
    %1153 = vmatpush1.msra.mxu0 %v1132
    %1154 = vmatprep.subr.mxu0 0.0
    %1155 = vmatpush1.msra.mxu0 %v1133
    %1156 = vmatprep.subr.mxu0 0.0
    %1157 = vmatpush1.msra.mxu0 %v1134
    %1158 = vmatprep.subr.mxu0 0.0
    %1159 = vmatpush1.msra.mxu0 %v1135
    %1160 = vmatprep.subr.mxu0 0.0
    %1161 = vmatpush1.msra.mxu0 %v1136
    %1162 = vmatprep.subr.mxu0 0.0
    %1163 = vmatpush1.msra.mxu0 %v1137
    %1164 = vmatprep.subr.mxu0 0.0
    %1165 = vmatpush1.msra.mxu0 %v1138
    %1166 = vmatprep.subr.mxu0 0.0
    %1167 = vmatpush1.msra.mxu0 %v1139
    %1168 = vmatprep.subr.mxu0 0.0
    %1169 = vmatpush1.msra.mxu0 %v1140
    %1170 = vmatprep.subr.mxu0 0.0
    %1171 = vmatpush1.msra.mxu0 %v1141
    %1172 = vmatprep.subr.mxu0 0.0
    %1173 = vmatpush1.msra.mxu0 %v1142
    %1174 = vmatprep.subr.mxu0 0.0
    %1175 = vmatpush1.msra.mxu0 %v1143
    %1176 = vmatprep.subr.mxu0 0.0
    %1177 = vmatpush1.msra.mxu0 %v1144
    %1178 = vmatprep.subr.mxu0 0.0
    %1179 = vmatpush1.msra.mxu0 %v1145
    %1180 = vmatprep.subr.mxu0 0.0
    %1181 = vmatpush1.msra.mxu0 %v1146
    %1182 = vmatprep.subr.mxu0 0.0
    %1183 = vmatpush1.msra.mxu0 %v1147
    %1184 = vmatprep.subr.mxu0 0.0
    %1185 = vmatpush1.msra.mxu0 0.0
    %1186 = vmatprep.subr.mxu0 0.0
    %1187 = vmatpush1.msra.mxu0 0.0
    %1188 = vmatprep.subr.mxu0 0.0
    %1189 = vmatpush1.msra.mxu0 0.0
    %1190 = vmatprep.subr.mxu0 0.0
    %1191 = vmatpush1.msra.mxu0 0.0
    %1192 = vmatprep.subr.mxu0 0.0
    %1193 = vmatpush1.msra.mxu0 0.0
    %1194 = vmatprep.subr.mxu0 0.0
    %1195 = vmatpush1.msra.mxu0 0.0
    %1196 = vmatprep.subr.mxu0 0.0
    %1197 = vmatpush1.msra.mxu0 0.0
    %1198 = vmatprep.subr.mxu0 0.0
    %1199 = vmatpush1.msra.mxu0 0.0
    %1200 = vmatprep.subr.mxu0 0.0
    %1201 = vmatpush1.msra.mxu0 0.0
    %1202 = vmatprep.subr.mxu0 0.0
    %1203 = vmatpush1.msra.mxu0 0.0
    %1204 = vmatprep.subr.mxu0 0.0
    %1205 = vmatpush1.msra.mxu0 0.0
    %1206 = vmatprep.subr.mxu0 0.0
    %1207 = vmatpush1.msra.mxu0 0.0
    %1208 = vmatprep.subr.mxu0 0.0
    %1209 = vmatpush1.msra.mxu0 0.0
    %1210 = vmatprep.subr.mxu0 0.0
    %1211 = vmatpush1.msra.mxu0 0.0
    %1212 = vmatprep.subr.mxu0 0.0
    %1213 = vmatpush1.msra.mxu0 0.0
    %1214 = vmatprep.subr.mxu0 0.0
    %1215 = vmatpush1.msra.mxu0 0.0
    %1216 = vmatprep.mubr.f32.mxu0 0.0
    %1217 = vmatmul.mubr.f32.gmra.mrb[0].mxu0 %v1124
    %v1218 = vpop.f32.mrb[0].mxu0
    %v1219 = vadd.f32 %v1151, %v1218
    %v1220 = vpop.f32.mrb[0].mxu0
    %1221 = vmatprep.mubr.f32.mxu0 0.0
    %1222 = vmatmul.mubr.f32.gmra.mrb[0].mxu0 %v1125
    %v1223 = vpop.f32.mrb[0].mxu0
    %v1224 = vadd.f32 %v1151, %v1223
    %v1225 = vpop.f32.mrb[0].mxu0
    %1226 = vmatprep.mubr.f32.mxu0 0.0
    %1227 = vmatmul.mubr.f32.gmra.mrb[0].mxu0 %v1126
    %v1228 = vpop.f32.mrb[0].mxu0
    %v1229 = vadd.f32 %v1151, %v1228
    %v1230 = vpop.f32.mrb[0].mxu0
    %1231 = vmatprep.mubr.f32.mxu0 0.0
    %1232 = vmatmul.mubr.f32.gmra.mrb[0].mxu0 %v1127
    %v1233 = vpop.f32.mrb[0].mxu0
    %v1234 = vadd.f32 %v1151, %v1233
    %v1235 = vpop.f32.mrb[0].mxu0
    %1236 = vmatprep.mubr.f32.mxu0 0.0
    %1237 = vmatmul.mubr.f32.gmra.mrb[0].mxu0 %v1128
    %v1238 = vpop.f32.mrb[0].mxu0
    %v1239 = vadd.f32 %v1151, %v1238
    %v1240 = vpop.f32.mrb[0].mxu0
    %1241 = vmatprep.mubr.f32.mxu0 0.0
    %1242 = vmatmul.mubr.f32.gmra.mrb[0].mxu0 %v1129
    %v1243 = vpop.f32.mrb[0].mxu0
    %v1244 = vadd.f32 %v1151, %v1243
    %v1245 = vpop.f32.mrb[0].mxu0
    %1246 = vmatprep.mubr.f32.mxu0 0.0
    %1247 = vmatmul.mubr.f32.gmra.mrb[0].mxu0 %v1130
    %v1248 = vpop.f32.mrb[0].mxu0
    %v1249 = vadd.f32 %v1151, %v1248
    %v1250 = vpop.f32.mrb[0].mxu0
    %1251 = vmatprep.mubr.f32.mxu0 0.0
    %1252 = vmatmul.mubr.f32.gmra.mrb[0].mxu0 %v1131
    %v1253 = vpop.f32.mrb[0].mxu0
    %v1254 = vadd.f32 %v1151, %v1253
    %v1255 = vpop.f32.mrb[0].mxu0
    %1256 = vdwg.mxu0
    %v1257 = vadd.f32 %v1219, %v1224
    %v1258 = vadd.f32 %v1257, %v1229
    %v1259 = vadd.f32 %v1258, %v1234
    %v1260 = vadd.f32 %v1259, %v1239
    %v1261 = vadd.f32 %v1260, %v1244
    %v1262 = vadd.f32 %v1261, %v1249
    %v1263 = vadd.f32 %v1262, %v1254
    %v1264 = vrot.slane %v1263, 4
    %v1265 = vadd.f32 %v1263, %v1264
    %v1266 = vrot.slane %v1265, 2
    %v1267 = vadd.f32 %v1265, %v1266
    %v1268 = vrot.slane %v1267, 1
    %v1269 = vadd.f32 %v1267, %v1268
    %v1270 = vmul.f32 %v1269, %v416
    %v1271 = vmul.f32 %v1219, %v1219
    %v1272 = vmul.f32 %v1224, %v1224
    %v1273 = vmul.f32 %v1229, %v1229
    %v1274 = vmul.f32 %v1234, %v1234
    %v1275 = vmul.f32 %v1239, %v1239
    %v1276 = vmul.f32 %v1244, %v1244
    %v1277 = vmul.f32 %v1249, %v1249
    %v1278 = vmul.f32 %v1254, %v1254
    %v1279 = vadd.f32 %v1271, %v1272
    %v1280 = vadd.f32 %v1279, %v1273
    %v1281 = vadd.f32 %v1280, %v1274
    %v1282 = vadd.f32 %v1281, %v1275
    %v1283 = vadd.f32 %v1282, %v1276
    %v1284 = vadd.f32 %v1283, %v1277
    %v1285 = vadd.f32 %v1284, %v1278
    %v1286 = vrot.slane %v1285, 4
    %v1287 = vadd.f32 %v1285, %v1286
    %v1288 = vrot.slane %v1287, 2
    %v1289 = vadd.f32 %v1287, %v1288
    %v1290 = vrot.slane %v1289, 1
    %v1291 = vadd.f32 %v1289, %v1290
    %v1292 = vmul.f32 %v1291, %v416
    %v1293 = vmul.f32 %v1270, %v1270
    %v1294 = vsub.f32 %v1292, %v1293
    %v1295 = vmax.f32 %v1294, 0.0
    %v1296 = vsub.f32 %v1219, %v1270
    %v1297 = vsub.f32 %v1224, %v1270
    %v1298 = vsub.f32 %v1229, %v1270
    %v1299 = vsub.f32 %v1234, %v1270
    %v1300 = vsub.f32 %v1239, %v1270
    %v1301 = vsub.f32 %v1244, %v1270
    %v1302 = vsub.f32 %v1249, %v1270
    %v1303 = vsub.f32 %v1254, %v1270
    %v1304 = vadd.f32 %v1295, 1e-05
    %v1305 = vrsqrt.pop %v1304
    %v1306 = vmul.f32 %v1296, %v1305
    %v1307 = vmul.f32 %v1297, %v1305
    %v1308 = vmul.f32 %v1298, %v1305
    %v1309 = vmul.f32 %v1299, %v1305
    %v1310 = vmul.f32 %v1300, %v1305
    %v1311 = vmul.f32 %v1301, %v1305
    %v1312 = vmul.f32 %v1302, %v1305
    %v1313 = vmul.f32 %v1303, %v1305
    %v1314 = vlaneseq
    %v1315 = vshrl.u32 %v1314, 7
    %v1316 = vsub.s32 4, %v1315
    %v1317 = vrot.slane %v804, %v1316
    %v1318 = vmul.f32 %v1306, %v1317
    %v1319 = vmul.f32 %v1307, %v1317
    %v1320 = vmul.f32 %v1308, %v1317
    %v1321 = vmul.f32 %v1309, %v1317
    %v1322 = vmul.f32 %v1310, %v1317
    %v1323 = vmul.f32 %v1311, %v1317
    %v1324 = vmul.f32 %v1312, %v1317
    %v1325 = vmul.f32 %v1313, %v1317
    %v1326 = vlaneseq
    %v1327 = vshrl.u32 %v1326, 7
    %v1328 = vsub.s32 5, %v1327
    %v1329 = vrot.slane %v804, %v1328
    %v1330 = vadd.f32 %v1318, %v1329
    %v1331 = vadd.f32 %v1319, %v1329
    %v1332 = vadd.f32 %v1320, %v1329
    %v1333 = vadd.f32 %v1321, %v1329
    %v1334 = vadd.f32 %v1322, %v1329
    %v1335 = vadd.f32 %v1323, %v1329
    %v1336 = vadd.f32 %v1324, %v1329
    %v1337 = vadd.f32 %v1325, %v1329
    %v1338 = vmax.f32 %v1330, 0.0
    %v1339 = vmax.f32 %v1331, 0.0
    %v1340 = vmax.f32 %v1332, 0.0
    %v1341 = vmax.f32 %v1333, 0.0
    %v1342 = vmax.f32 %v1334, 0.0
    %v1343 = vmax.f32 %v1335, 0.0
    %v1344 = vmax.f32 %v1336, 0.0
    %v1345 = vmax.f32 %v1337, 0.0
    %v1346 = vadd.f32 %v1338, %v1339
    %v1347 = vadd.f32 %v1346, %v1340
    %v1348 = vadd.f32 %v1347, %v1341
    %v1349 = vadd.f32 %v1348, %v1342
    %v1350 = vadd.f32 %v1349, %v1343
    %v1351 = vadd.f32 %v1350, %v1344
    %v1352 = vadd.f32 %v1351, %v1345
    %v1353 = vrot.slane %v1352, 4
    %v1354 = vadd.f32 %v1352, %v1353
    %v1355 = vrot.slane %v1354, 2
    %v1356 = vadd.f32 %v1354, %v1355
    %v1357 = vrot.slane %v1356, 1
    %v1358 = vadd.f32 %v1356, %v1357
    %v1359 = vmul.f32 %v1358, %v416
    %v1360 = vmul.f32 %v1338, %v1338
    %v1361 = vmul.f32 %v1339, %v1339
    %v1362 = vmul.f32 %v1340, %v1340
    %v1363 = vmul.f32 %v1341, %v1341
    %v1364 = vmul.f32 %v1342, %v1342
    %v1365 = vmul.f32 %v1343, %v1343
    %v1366 = vmul.f32 %v1344, %v1344
    %v1367 = vmul.f32 %v1345, %v1345
    %v1368 = vadd.f32 %v1360, %v1361
    %v1369 = vadd.f32 %v1368, %v1362
    %v1370 = vadd.f32 %v1369, %v1363
    %v1371 = vadd.f32 %v1370, %v1364
    %v1372 = vadd.f32 %v1371, %v1365
    %v1373 = vadd.f32 %v1372, %v1366
    %v1374 = vadd.f32 %v1373, %v1367
    %v1375 = vrot.slane %v1374, 4
    %v1376 = vadd.f32 %v1374, %v1375
    %v1377 = vrot.slane %v1376, 2
    %v1378 = vadd.f32 %v1376, %v1377
    %v1379 = vrot.slane %v1378, 1
    %v1380 = vadd.f32 %v1378, %v1379
    %v1381 = vmul.f32 %v1380, %v416
    %v1382 = vmul.f32 %v1359, %v1359
    %v1383 = vsub.f32 %v1381, %v1382
    %v1384 = vmax.f32 %v1383, 0.0
    %v1385 = vsub.f32 %v1338, %v1359
    %v1386 = vsub.f32 %v1339, %v1359
    %v1387 = vsub.f32 %v1340, %v1359
    %v1388 = vsub.f32 %v1341, %v1359
    %v1389 = vsub.f32 %v1342, %v1359
    %v1390 = vsub.f32 %v1343, %v1359
    %v1391 = vsub.f32 %v1344, %v1359
    %v1392 = vsub.f32 %v1345, %v1359
    %v1393 = vadd.f32 %v1384, 1e-05
    %v1394 = vrsqrt.pop %v1393
    %v1395 = vmul.f32 %v1385, %v1394
    %v1396 = vmul.f32 %v1386, %v1394
    %v1397 = vmul.f32 %v1387, %v1394
    %v1398 = vmul.f32 %v1388, %v1394
    %v1399 = vmul.f32 %v1389, %v1394
    %v1400 = vmul.f32 %v1390, %v1394
    %v1401 = vmul.f32 %v1391, %v1394
    %v1402 = vmul.f32 %v1392, %v1394
    %v1403 = vlaneseq
    %v1404 = vshrl.u32 %v1403, 7
    %v1405 = vsub.s32 6, %v1404
    %v1406 = vrot.slane %v804, %v1405
    %v1407 = vmul.f32 %v1395, %v1406
    %v1408 = vmul.f32 %v1396, %v1406
    %v1409 = vmul.f32 %v1397, %v1406
    %v1410 = vmul.f32 %v1398, %v1406
    %v1411 = vmul.f32 %v1399, %v1406
    %v1412 = vmul.f32 %v1400, %v1406
    %v1413 = vmul.f32 %v1401, %v1406
    %v1414 = vmul.f32 %v1402, %v1406
    %v1415 = vlaneseq
    %v1416 = vshrl.u32 %v1415, 7
    %v1417 = vsub.s32 7, %v1416
    %v1418 = vrot.slane %v804, %v1417
    %v1419 = vadd.f32 %v1407, %v1418
    %v1420 = vadd.f32 %v1408, %v1418
    %v1421 = vadd.f32 %v1409, %v1418
    %v1422 = vadd.f32 %v1410, %v1418
    %v1423 = vadd.f32 %v1411, %v1418
    %v1424 = vadd.f32 %v1412, %v1418
    %v1425 = vadd.f32 %v1413, %v1418
    %v1426 = vadd.f32 %v1414, %v1418
    %v1427 = vmax.f32 %v1419, 0.0
    %v1428 = vmax.f32 %v1420, 0.0
    %v1429 = vmax.f32 %v1421, 0.0
    %v1430 = vmax.f32 %v1422, 0.0
    %v1431 = vmax.f32 %v1423, 0.0
    %v1432 = vmax.f32 %v1424, 0.0
    %v1433 = vmax.f32 %v1425, 0.0
    %v1434 = vmax.f32 %v1426, 0.0
    %1435 = vst [vmem:[#allocation14] sm:$0xff] %v1427
    %1436 = vst [vmem:[#allocation14 + $0x8] sm:$0xff] %v1428
    %1437 = vst [vmem:[#allocation14 + $0x10] sm:$0xff] %v1429
    %1438 = vst [vmem:[#allocation14 + $0x18] sm:$0xff] %v1430
    %1439 = vst [vmem:[#allocation14 + $0x20] sm:$0xff] %v1431
    %1440 = vst [vmem:[#allocation14 + $0x28] sm:$0xff] %v1432
    %1441 = vst [vmem:[#allocation14 + $0x30] sm:$0xff] %v1433
    %1442 = vst [vmem:[#allocation14 + $0x38] sm:$0xff] %v1434
    // Predicated region
    $region58: #{tpu_custom_call.1} parent=1 // pred_check
      _
    $region59: #{tpu_custom_call.1} parent=1 // pred_check_branch
      %1444 = sbr.rel (0) target = $region61
    $region60: #{tpu_custom_call.1} parent=1 // pred_region
      %s1446 = ssub.s32 1024, 1024
      %1447 = vsyncadd [#allocation4], %s1446
      %s1448 = sshll.u32 [#allocation13], 4
      %s1449 = int_to_ptr.vmem [resolvable:$true] %s1448
      %1454 = dma.vmem_to_hbm [thread:$0]  %s1449, 1024, %s8, [#allocation4], 128, 128, 8
    $region61: #{tpu_custom_call.1} parent=1 // pred_fallthru
      _
    // Predicated region
    $region62: #{tpu_custom_call.1} parent=1 // pred_check
      _
    $region63: #{tpu_custom_call.1} parent=1 // pred_check_branch
      %1456 = sbr.rel (0) target = $region65
    $region64: #{tpu_custom_call.1} parent=1 // pred_region
      %s1458 = ssub.s32 1024, 1024
      %1459 = vsyncadd [#allocation15], %s1458
      %s1460 = sshll.u32 [#allocation14], 4
      %s1461 = int_to_ptr.vmem [resolvable:$true] %s1460
      %1466 = dma.vmem_to_hbm [thread:$0]  %s1461, 1024, %s9, [#allocation15], 128, 128, 8
    $region65: #{tpu_custom_call.1} parent=1 // pred_fallthru
      _
    // Predicated region
    $region66: #{tpu_custom_call.1} parent=1 // pred_check
      _
    $region67: #{tpu_custom_call.1} parent=1 // pred_check_branch
      %1468 = sbr.rel (0) target = $region69
    $region68: #{tpu_custom_call.1} parent=1 // pred_region
      %1469 = dma.done [#allocation4], 1024
    $region69: #{tpu_custom_call.1} parent=1 // pred_fallthru
      _
    // Predicated region
    $region70: #{tpu_custom_call.1} parent=1 // pred_check
      _
    $region71: #{tpu_custom_call.1} parent=1 // pred_check_branch
      %1471 = sbr.rel (0) target = $region73
    $region72: #{tpu_custom_call.1} parent=1 // pred_region
      %1472 = dma.done [#allocation15], 1024
    $region73: #{tpu_custom_call.1} parent=1 // pred_fallthru
      _
    %1473 = vsyncpa [#allocation3], 1
    %1474 = vsyncpa [#allocation6], 1
    %1475 = vsyncpa [#allocation9], 1
    %1476 = vsyncpa [#allocation12], 1
    %1477 = vsyncpa [#allocation4], 1
    %1478 = vsyncpa [#allocation15], 1

</llo_original>
